<compile_context>
chip_gen: v7x
topology: tpu7x:2x2x1
jax: 0.10.0
libtpu: 0.0.40
codegen_flags: <defaults>
</compile_context>

<pallas_src>
import functools

import jax
import jax.numpy as jnp
from jax import lax
from jax.experimental import pallas as pl
from jax.experimental.pallas import tpu as pltpu


def _round_up(x, m):
    return (x + m - 1) // m * m


def _pick_images_per_step(n, cin, cout, s_img, dtype_bytes):
    """Images per grid step: fit double-buffered blocks in a VMEM budget,
    but keep >= 2 grid steps so dual-TensorCore chips (v7x) use both cores."""
    try:
        vmem_cap = int(pltpu.get_tpu_info().vmem_capacity_bytes)
    except Exception:
        vmem_cap = 64 * 1024 * 1024
    budget = vmem_cap // 4                                  # >=2x headroom
    per_image = 2 * (cin + cout) * s_img * dtype_bytes      # double-buffered in+out
    nb_vmem = max(1, budget // per_image)
    nb_tc = max(1, n // 2)                                  # >= 2 parallel steps
    return int(max(1, min(nb_vmem, nb_tc, n, 16)))


def _conv_tap_gemm_kernel(x_ref, w_ref, b_ref, o_ref, *, nb, cin, cout,
                          kh, kw, wp, s_img, s_val, act):
    # x_ref: (Cin, Nb*S)   padded images, flattened spatial on the lane axis
    # w_ref: (Cout, K)     conv weight flattened with (kh, kw, cin) ordering
    # b_ref: (Cout, 1)     bias (broadcast over the lane axis)
    # o_ref: (Cout, Nb*S)  dense (stride-1) conv outputs at lanes [0, s_val)
    x = x_ref[...]
    if act:
        # Fused pre-activation ReLU, applied once to the raw tile.
        # ReLU(0) = 0, so it commutes with the zero padding.
        x = jnp.maximum(x, 0.0)
    w = w_ref[...]
    b = b_ref[...]
    for j in range(nb):
        base = j * s_img                      # 128-aligned per-image lane base
        acc = jnp.zeros((cout, s_val), jnp.float32)
        for ih in range(kh):
            for iw in range(kw):
                t = ih * kw + iw
                off = base + ih * wp + iw
                x_tap = x[:, off:off + s_val]             # (Cin, Sval) lane slice
                w_tap = w[:, t * cin:(t + 1) * cin]       # (Cout, Cin)
                acc = acc + jnp.dot(w_tap, x_tap,
                                    preferred_element_type=jnp.float32)
        acc = acc + b
        o_ref[:, base:base + s_val] = acc.astype(o_ref.dtype)


def conv_forward(x, weight, bias, *, stride, padding, act):
    """x: (N, Cin, H, W) NCHW, weight: (Cout, Cin, KH, KW) OIHW, bias: (Cout,)."""
    N, Cin, H, W = x.shape
    Cout, _, KH, KW = weight.shape
    Hp, Wp = H + 2 * padding, W + 2 * padding
    Ho = (Hp - KH) // stride + 1
    Wo = (Wp - KW) // stride + 1
    Ho_d, Wo_d = Hp - KH + 1, Wp - KW + 1     # dense (stride-1) output grid
    K = KH * KW * Cin

    # Per-image lane slots.  s_val = dense output positions (Ho_d rows of the
    # full padded width Wp).  s_img = input slot, big enough that the furthest
    # tap read ((KH-1)*Wp + KW-1 past any computed position) stays inside the
    # same image's slot; rounded up to a multiple of 128 for lane alignment.
    s_val = Ho_d * Wp
    s_img = _round_up(max(Hp * Wp, s_val + (KH - 1) * Wp + (KW - 1)), 128)

    nb = _pick_images_per_step(N, Cin, Cout, s_img, 4)
    n_steps = int(pl.cdiv(N, nb))
    n_pad = n_steps * nb

    # ---- wrapper-side layout plumbing (1x data; no im2col expansion) ----
    x_pad = jnp.pad(x, ((0, n_pad - N), (0, 0),
                        (padding, padding), (padding, padding)))
    x_flat = x_pad.reshape(n_pad, Cin, Hp * Wp)
    x_flat = jnp.pad(x_flat, ((0, 0), (0, 0), (0, s_img - Hp * Wp)))
    x_flat = jnp.transpose(x_flat, (1, 0, 2)).reshape(Cin, n_pad * s_img)

    # Weight flattened with (kh, kw, cin) ordering to match the kernel's taps.
    w_flat = jnp.transpose(weight, (0, 2, 3, 1)).reshape(Cout, K)
    b2 = bias.reshape(Cout, 1)

    kernel = functools.partial(
        _conv_tap_gemm_kernel, nb=nb, cin=Cin, cout=Cout, kh=KH, kw=KW,
        wp=Wp, s_img=s_img, s_val=s_val, act=act)

    blk_bytes = 4 * nb * s_img * (Cin + Cout)     # one in + one out block (f32)
    vmem_limit = int(min(max(4 * blk_bytes + (2 << 20), 16 << 20), 32 << 20))

    cost = pl.CostEstimate(
        flops=2 * n_pad * Cout * K * s_val,
        transcendentals=0,
        bytes_accessed=(x_flat.size + w_flat.size + b2.size
                        + Cout * n_pad * s_img) * 4)

    out_flat = pl.pallas_call(
        kernel,
        out_shape=jax.ShapeDtypeStruct((Cout, n_pad * s_img), x.dtype),
        grid=(n_steps,),
        in_specs=[
            pl.BlockSpec((Cin, nb * s_img), lambda s: (0, s)),
            pl.BlockSpec((Cout, K), lambda s: (0, 0)),     # resident weight
            pl.BlockSpec((Cout, 1), lambda s: (0, 0)),     # resident bias
        ],
        out_specs=pl.BlockSpec((Cout, nb * s_img), lambda s: (0, s)),
        compiler_params=pltpu.CompilerParams(
            dimension_semantics=("parallel",),
            vmem_limit_bytes=vmem_limit),
        cost_estimate=cost,
    )(x_flat, w_flat, b2)

    # Drop lane padding / garbage columns, apply the stride, restore NCHW.
    out = out_flat.reshape(Cout, n_pad, s_img)[:, :N, :s_val]
    out = out.reshape(Cout, N, Ho_d, Wp)[:, :, :, :Wo_d]
    out = out[:, :, :(Ho - 1) * stride + 1:stride,
              :(Wo - 1) * stride + 1:stride]
    return jnp.transpose(out, (1, 0, 2, 3))


def spectral_normalize(weight, key, n_iter=1, eps=1e-12):
    """Parameter-setup glue mimicking torch.nn.utils.spectral_norm:
    normalize the conv weight by its approximate largest singular value
    (one power iteration from a deterministic random u)."""
    Cout = weight.shape[0]
    w_mat = weight.reshape(Cout, -1)
    u = jax.random.normal(key, (Cout,), weight.dtype)
    u = u / (jnp.linalg.norm(u) + eps)
    v = None
    for _ in range(n_iter):
        v = w_mat.T @ u
        v = v / (jnp.linalg.norm(v) + eps)
        u = w_mat @ v
        u = u / (jnp.linalg.norm(u) + eps)
    sigma = u @ (w_mat @ v)
    return weight / sigma


if __name__ == "__main__":
    key = jax.random.PRNGKey(0)
    k_x, k_w, k_b, k_u = jax.random.split(key, 4)

    # Module config: Conv(in_ch=4, out_ch=8, kernel_size=3, stride=1,
    #                     padding=1, sn=True, act=True)
    N, in_ch, H, W = 2, 4, 16, 16
    out_ch, kernel_size, stride, padding = 8, 3, 1, 1
    sn, act = True, True

    x = jax.random.normal(k_x, (N, in_ch, H, W), jnp.float32)

    # Deterministic Conv2d-style parameter init (uniform in +/- 1/sqrt(fan_in)).
    fan_in = in_ch * kernel_size * kernel_size
    bound = 1.0 / (fan_in ** 0.5)
    weight = jax.random.uniform(
        k_w, (out_ch, in_ch, kernel_size, kernel_size), jnp.float32,
        -bound, bound)
    bias = jax.random.uniform(k_b, (out_ch,), jnp.float32, -bound, bound)
    if sn:
        weight = spectral_normalize(weight, k_u)

    out = conv_forward(x, weight, bias, stride=stride, padding=padding,
                       act=act)
    out = jax.block_until_ready(out)

    # Pure-JAX reference: ReLU -> conv2d -> + bias (same semantics as the
    # PyTorch module forward).
    xr = jnp.maximum(x, 0.0) if act else x
    ref = lax.conv_general_dilated(
        xr, weight, window_strides=(stride, stride),
        padding=[(padding, padding), (padding, padding)],
        dimension_numbers=("NCHW", "OIHW", "NCHW"))
    ref = ref + bias.reshape(1, out_ch, 1, 1)

    assert out.shape == ref.shape, (out.shape, ref.shape)
    assert jnp.allclose(out, ref, rtol=1e-4, atol=1e-4), (
        float(jnp.max(jnp.abs(out - ref))))
    print("KERNEL_OK")
</pallas_src>

<mosaic_0001>
module attributes {stable_mosaic.version = 11 : i64} {
  func.func @_conv_tap_gemm_kernel(%arg0: i32, %arg1: memref<4x384xf32, #tpu.memory_space<vmem>>, %arg2: memref<8x36xf32, #tpu.memory_space<vmem>>, %arg3: memref<8x1xf32, #tpu.memory_space<vmem>>, %arg4: memref<8x384xf32, #tpu.memory_space<vmem>>) attributes {dimension_semantics = [#tpu.dimension_semantics<parallel>], iteration_bounds = array<i64: 2>, scalar_prefetch = 0 : i64, scratch_operands = 0 : i64, tpu.core_type = #tpu.core_type<tc>, window_params = [{transform_indices = @transform_0, window_bounds = array<i64: 4, 384>}, {pipeline_mode = #tpu.pipeline_mode<synchronous>, transform_indices = @transform_1, window_bounds = array<i64: 8, 36>}, {pipeline_mode = #tpu.pipeline_mode<synchronous>, transform_indices = @transform_2, window_bounds = array<i64: 8, 1>}, {transform_indices = @transform_3, window_bounds = array<i64: 8, 384>}]} {
    %c0 = arith.constant 0 : index
    %c0_0 = arith.constant 0 : index
    %0 = vector.load %arg1[%c0, %c0_0] : memref<4x384xf32, #tpu.memory_space<vmem>>, vector<4x384xf32>
    %cst = arith.constant 0.000000e+00 : f32
    %1 = vector.broadcast %cst : f32 to vector<4x384xf32>
    %2 = arith.maximumf %0, %1 : vector<4x384xf32>
    %c0_1 = arith.constant 0 : index
    %c0_2 = arith.constant 0 : index
    %3 = vector.load %arg2[%c0_1, %c0_2] : memref<8x36xf32, #tpu.memory_space<vmem>>, vector<8x36xf32>
    %c0_3 = arith.constant 0 : index
    %c0_4 = arith.constant 0 : index
    %4 = vector.load %arg3[%c0_3, %c0_4] : memref<8x1xf32, #tpu.memory_space<vmem>>, vector<8x1xf32>
    %cst_5 = arith.constant 0.000000e+00 : f32
    %5 = vector.broadcast %cst_5 : f32 to vector<8x288xf32>
    %6 = vector.extract_strided_slice %2 {offsets = [0, 0], sizes = [4, 288], strides = [1, 1]} : vector<4x384xf32> to vector<4x288xf32>
    %7 = vector.extract_strided_slice %3 {offsets = [0, 0], sizes = [8, 4], strides = [1, 1]} : vector<8x36xf32> to vector<8x4xf32>
    %cst_6 = arith.constant dense<0.000000e+00> : vector<8x288xf32>
    %8 = tpu.matmul %7, %6, %cst_6 {dimension_numbers = #tpu.dot_dimension_numbers<[1], [0], [0], [1], [0, 0, 1, 1], [], []>} : vector<8x4xf32>, vector<4x288xf32>, vector<8x288xf32> -> vector<8x288xf32>
    %9 = arith.addf %5, %8 : vector<8x288xf32>
    %10 = vector.extract_strided_slice %2 {offsets = [0, 1], sizes = [4, 288], strides = [1, 1]} : vector<4x384xf32> to vector<4x288xf32>
    %11 = vector.extract_strided_slice %3 {offsets = [0, 4], sizes = [8, 4], strides = [1, 1]} : vector<8x36xf32> to vector<8x4xf32>
    %cst_7 = arith.constant dense<0.000000e+00> : vector<8x288xf32>
    %12 = tpu.matmul %11, %10, %cst_7 {dimension_numbers = #tpu.dot_dimension_numbers<[1], [0], [0], [1], [0, 0, 1, 1], [], []>} : vector<8x4xf32>, vector<4x288xf32>, vector<8x288xf32> -> vector<8x288xf32>
    %13 = arith.addf %9, %12 : vector<8x288xf32>
    %14 = vector.extract_strided_slice %2 {offsets = [0, 2], sizes = [4, 288], strides = [1, 1]} : vector<4x384xf32> to vector<4x288xf32>
    %15 = vector.extract_strided_slice %3 {offsets = [0, 8], sizes = [8, 4], strides = [1, 1]} : vector<8x36xf32> to vector<8x4xf32>
    %cst_8 = arith.constant dense<0.000000e+00> : vector<8x288xf32>
    %16 = tpu.matmul %15, %14, %cst_8 {dimension_numbers = #tpu.dot_dimension_numbers<[1], [0], [0], [1], [0, 0, 1, 1], [], []>} : vector<8x4xf32>, vector<4x288xf32>, vector<8x288xf32> -> vector<8x288xf32>
    %17 = arith.addf %13, %16 : vector<8x288xf32>
    %18 = vector.extract_strided_slice %2 {offsets = [0, 18], sizes = [4, 288], strides = [1, 1]} : vector<4x384xf32> to vector<4x288xf32>
    %19 = vector.extract_strided_slice %3 {offsets = [0, 12], sizes = [8, 4], strides = [1, 1]} : vector<8x36xf32> to vector<8x4xf32>
    %cst_9 = arith.constant dense<0.000000e+00> : vector<8x288xf32>
    %20 = tpu.matmul %19, %18, %cst_9 {dimension_numbers = #tpu.dot_dimension_numbers<[1], [0], [0], [1], [0, 0, 1, 1], [], []>} : vector<8x4xf32>, vector<4x288xf32>, vector<8x288xf32> -> vector<8x288xf32>
    %21 = arith.addf %17, %20 : vector<8x288xf32>
    %22 = vector.extract_strided_slice %2 {offsets = [0, 19], sizes = [4, 288], strides = [1, 1]} : vector<4x384xf32> to vector<4x288xf32>
    %23 = vector.extract_strided_slice %3 {offsets = [0, 16], sizes = [8, 4], strides = [1, 1]} : vector<8x36xf32> to vector<8x4xf32>
    %cst_10 = arith.constant dense<0.000000e+00> : vector<8x288xf32>
    %24 = tpu.matmul %23, %22, %cst_10 {dimension_numbers = #tpu.dot_dimension_numbers<[1], [0], [0], [1], [0, 0, 1, 1], [], []>} : vector<8x4xf32>, vector<4x288xf32>, vector<8x288xf32> -> vector<8x288xf32>
    %25 = arith.addf %21, %24 : vector<8x288xf32>
    %26 = vector.extract_strided_slice %2 {offsets = [0, 20], sizes = [4, 288], strides = [1, 1]} : vector<4x384xf32> to vector<4x288xf32>
    %27 = vector.extract_strided_slice %3 {offsets = [0, 20], sizes = [8, 4], strides = [1, 1]} : vector<8x36xf32> to vector<8x4xf32>
    %cst_11 = arith.constant dense<0.000000e+00> : vector<8x288xf32>
    %28 = tpu.matmul %27, %26, %cst_11 {dimension_numbers = #tpu.dot_dimension_numbers<[1], [0], [0], [1], [0, 0, 1, 1], [], []>} : vector<8x4xf32>, vector<4x288xf32>, vector<8x288xf32> -> vector<8x288xf32>
    %29 = arith.addf %25, %28 : vector<8x288xf32>
    %30 = vector.extract_strided_slice %2 {offsets = [0, 36], sizes = [4, 288], strides = [1, 1]} : vector<4x384xf32> to vector<4x288xf32>
    %31 = vector.extract_strided_slice %3 {offsets = [0, 24], sizes = [8, 4], strides = [1, 1]} : vector<8x36xf32> to vector<8x4xf32>
    %cst_12 = arith.constant dense<0.000000e+00> : vector<8x288xf32>
    %32 = tpu.matmul %31, %30, %cst_12 {dimension_numbers = #tpu.dot_dimension_numbers<[1], [0], [0], [1], [0, 0, 1, 1], [], []>} : vector<8x4xf32>, vector<4x288xf32>, vector<8x288xf32> -> vector<8x288xf32>
    %33 = arith.addf %29, %32 : vector<8x288xf32>
    %34 = vector.extract_strided_slice %2 {offsets = [0, 37], sizes = [4, 288], strides = [1, 1]} : vector<4x384xf32> to vector<4x288xf32>
    %35 = vector.extract_strided_slice %3 {offsets = [0, 28], sizes = [8, 4], strides = [1, 1]} : vector<8x36xf32> to vector<8x4xf32>
    %cst_13 = arith.constant dense<0.000000e+00> : vector<8x288xf32>
    %36 = tpu.matmul %35, %34, %cst_13 {dimension_numbers = #tpu.dot_dimension_numbers<[1], [0], [0], [1], [0, 0, 1, 1], [], []>} : vector<8x4xf32>, vector<4x288xf32>, vector<8x288xf32> -> vector<8x288xf32>
    %37 = arith.addf %33, %36 : vector<8x288xf32>
    %38 = vector.extract_strided_slice %2 {offsets = [0, 38], sizes = [4, 288], strides = [1, 1]} : vector<4x384xf32> to vector<4x288xf32>
    %39 = vector.extract_strided_slice %3 {offsets = [0, 32], sizes = [8, 4], strides = [1, 1]} : vector<8x36xf32> to vector<8x4xf32>
    %cst_14 = arith.constant dense<0.000000e+00> : vector<8x288xf32>
    %40 = tpu.matmul %39, %38, %cst_14 {dimension_numbers = #tpu.dot_dimension_numbers<[1], [0], [0], [1], [0, 0, 1, 1], [], []>} : vector<8x4xf32>, vector<4x288xf32>, vector<8x288xf32> -> vector<8x288xf32>
    %41 = arith.addf %37, %40 : vector<8x288xf32>
    %42 = vector.broadcast %4 : vector<8x1xf32> to vector<8x288xf32>
    %43 = arith.addf %41, %42 : vector<8x288xf32>
    %c0_15 = arith.constant 0 : index
    %c0_16 = arith.constant 0 : index
    %44 = vector.load %arg4[%c0_15, %c0_16] : memref<8x384xf32, #tpu.memory_space<vmem>>, vector<8x288xf32>
    tpu.vector_store %arg4[%c0_15, %c0_16], %43 {strides = array<i32>} : memref<8x384xf32, #tpu.memory_space<vmem>>, vector<8x288xf32>,
    return
  }
  func.func @transform_0(%arg0: i32) -> (i32, i32) {
    %c0_i32 = arith.constant 0 : i32
    %c0_i32_0 = arith.constant 0 : i32
    return %c0_i32, %arg0 : i32, i32
  }
  func.func @transform_1(%arg0: i32) -> (i32, i32) {
    %c0_i32 = arith.constant 0 : i32
    %c0_i32_0 = arith.constant 0 : i32
    %c0_i32_1 = arith.constant 0 : i32
    return %c0_i32, %c0_i32_0 : i32, i32
  }
  func.func @transform_2(%arg0: i32) -> (i32, i32) {
    %c0_i32 = arith.constant 0 : i32
    %c0_i32_0 = arith.constant 0 : i32
    %c0_i32_1 = arith.constant 0 : i32
    return %c0_i32, %c0_i32_0 : i32, i32
  }
  func.func @transform_3(%arg0: i32) -> (i32, i32) {
    %c0_i32 = arith.constant 0 : i32
    %c0_i32_0 = arith.constant 0 : i32
    return %c0_i32, %arg0 : i32, i32
  }
}

</mosaic_0001>

<llo_original>
// kernel: tpu_custom_call.1
$region0: #{tpu_custom_call.1}
  #allocation0 [shape = 'u32[]', space=smem, size = 0x4, offset = 0x4, fixed_abs, tag = 'smem constant byte address 0x4 - core index']
  #allocation1 [shape = 'u32[144,128]{1,0:T(1,128)}', space=vmem, size = 0x12000, scoped, tag = 'internal scratch']
  %s0 = inlined_call_operand.hbm [shape: f32[4,768], index: 0, kind: input, shape index: {}]
  %s1 = inlined_call_operand.vmem [shape: f32[8,36], index: 1, kind: input, shape index: {}]
  %s2 = inlined_call_operand.vmem [shape: f32[8,1], index: 2, kind: input, shape index: {}]
  %s3 = inlined_call_operand.hbm [shape: f32[8,768], index: 3, kind: output, shape index: {}]
  %s4 = sld [smem:[#allocation0]]
  $region49: #{tpu_custom_call.1} parent=0
    _
  %s6 = ssub.s32 1, %s4
  %s7 = scalar_select 0, %s6, %s4
  $region1: #{tpu_custom_call.1} parent=0
    #allocation2 [shape = 'u8[12288]{0}', space=vmem, size = 0x3000, scoped, tag = 'input window, operand 0']
    #allocation3 [shape = 's32[2]{0}', space=sflag, size = 0x8, scoped, tag = 'scoped memory for tpu_custom_call.1']
    #allocation4 [shape = 's32[2]{0}', space=sflag, size = 0x8, scoped, tag = 'scoped memory for tpu_custom_call.1']
    #allocation5 [shape = 'u8[24576]{0}', space=vmem, size = 0x6000, scoped, tag = 'output window, operand 0']
    %8 = vsyncpa [#allocation3], 0
    %s9 = scalar_lea.sflag [#allocation3], 1
    %10 = vsyncpa %s9, 0
    %11 = vsyncpa [#allocation4], 0
    %s12 = scalar_lea.sflag [#allocation4], 1
    %13 = vsyncpa %s12, 0
    loop: start=0, step=1, limit=4
    $region2: #{tpu_custom_call.1} parent=1 // loop_pre_header
      _
    $region3: #{tpu_custom_call.1} parent=1 // loop_header
      %s15 = sphi 0, %s19
      %p16 = scmp.ge.s32.totalorder %s15, 4
      %s25 = sphi 0, %s27
      %s28 = sphi 0, %s25
      %s29 = sphi 0, %s28
      %s45 = sphi 0, %s29
      %s49 = sphi 0, %s49
      %s51 = sphi 0, %s49
      %s52 = sphi 0, %s51
      %s66 = sphi 0, %s52
      %s70 = sphi 0, %s70
      %s72 = sphi 0, %s70
      %s73 = sphi 0, %s72
      %s87 = sphi 0, %s73
      %s93 = sphi 0, %s95
      %s96 = sphi 0, %s93
      %s97 = sphi 0, %s96
      %s113 = sphi 0, %s97
    $region4: #{tpu_custom_call.1} parent=1 // loop_header_branch
      %18 = sbr.rel (%p16) target = $region8
    $region5: #{tpu_custom_call.1} parent=1 // loop_body
      %s20 = ssub.s32 %s15, 1
      %s21 = ssub.s32 %s15, 2
      %s22 = sadd.s32 %s15, 1
      %s23 = ssub.s32 %s15, %s22
      %p24 = scmp.eq.s32.totalorder %s23, 0
      %s26 = sadd.s32 %s25, 1
      %s27 = scalar_select %p24, %s25, %s26
      %p30 = pneg %p24
      %p31 = scmp.eq.s32.totalorder %s15, 1
      %p32 = por %p30, %p31
      %p33 = scmp.ne.s32.totalorder %s25, %s28
      %p34 = scmp.eq.s32.totalorder %s15, 0
      %p35 = por %p33, %p34
      %p36 = scmp.ne.s32.totalorder %s25, %s28
      %p37 = scmp.eq.s32.totalorder %s20, 1
      %p38 = por %p36, %p37
      %p39 = scmp.ne.s32.totalorder %s28, %s29
      %p40 = scmp.eq.s32.totalorder %s20, 0
      %p41 = por %p39, %p40
      %p42 = scmp.ne.s32.totalorder %s28, %s29
      %p43 = scmp.eq.s32.totalorder %s21, 1
      %p44 = por %p42, %p43
      %p46 = scmp.ne.s32.totalorder %s29, %s45
      %p47 = scmp.eq.s32.totalorder %s21, 0
      %p48 = por %p46, %p47
      %s50 = sadd.s32 %s49, 1
      %p53 = scmp.eq.s32.totalorder %s15, 1
      %p54 = scmp.ne.s32.totalorder %s49, %s51
      %p55 = scmp.eq.s32.totalorder %s15, 0
      %p56 = por %p54, %p55
      %p57 = scmp.ne.s32.totalorder %s49, %s51
      %p58 = scmp.eq.s32.totalorder %s20, 1
      %p59 = por %p57, %p58
      %p60 = scmp.ne.s32.totalorder %s51, %s52
      %p61 = scmp.eq.s32.totalorder %s20, 0
      %p62 = por %p60, %p61
      %p63 = scmp.ne.s32.totalorder %s51, %s52
      %p64 = scmp.eq.s32.totalorder %s21, 1
      %p65 = por %p63, %p64
      %p67 = scmp.ne.s32.totalorder %s52, %s66
      %p68 = scmp.eq.s32.totalorder %s21, 0
      %p69 = por %p67, %p68
      %s71 = sadd.s32 %s70, 1
      %p74 = scmp.eq.s32.totalorder %s15, 1
      %p75 = scmp.ne.s32.totalorder %s70, %s72
      %p76 = scmp.eq.s32.totalorder %s15, 0
      %p77 = por %p75, %p76
      %p78 = scmp.ne.s32.totalorder %s70, %s72
      %p79 = scmp.eq.s32.totalorder %s20, 1
      %p80 = por %p78, %p79
      %p81 = scmp.ne.s32.totalorder %s72, %s73
      %p82 = scmp.eq.s32.totalorder %s20, 0
      %p83 = por %p81, %p82
      %p84 = scmp.ne.s32.totalorder %s72, %s73
      %p85 = scmp.eq.s32.totalorder %s21, 1
      %p86 = por %p84, %p85
      %p88 = scmp.ne.s32.totalorder %s73, %s87
      %p89 = scmp.eq.s32.totalorder %s21, 0
      %p90 = por %p88, %p89
      %s91 = ssub.s32 %s15, %s22
      %p92 = scmp.eq.s32.totalorder %s91, 0
      %s94 = sadd.s32 %s93, 1
      %s95 = scalar_select %p92, %s93, %s94
      %p98 = pneg %p92
      %p99 = scmp.eq.s32.totalorder %s15, 1
      %p100 = por %p98, %p99
      %p101 = scmp.ne.s32.totalorder %s93, %s96
      %p102 = scmp.eq.s32.totalorder %s15, 0
      %p103 = por %p101, %p102
      %p104 = scmp.ne.s32.totalorder %s93, %s96
      %p105 = scmp.eq.s32.totalorder %s20, 1
      %p106 = por %p104, %p105
      %p107 = scmp.ne.s32.totalorder %s96, %s97
      %p108 = scmp.eq.s32.totalorder %s20, 0
      %p109 = por %p107, %p108
      %p110 = scmp.ne.s32.totalorder %s96, %s97
      %p111 = scmp.eq.s32.totalorder %s21, 1
      %p112 = por %p110, %p111
      %p114 = scmp.ne.s32.totalorder %s97, %s113
      %p115 = scmp.eq.s32.totalorder %s21, 0
      %p116 = por %p114, %p115
      %p117 = scmp.le.s32.totalorder 1, %s15
      %p118 = scmp.lt.s32.totalorder %s15, 3
      %p119 = pnand %p117, %p118
      %p120 = pneg %p119
      // Predicated region
      $region9: #{tpu_custom_call.1} parent=5 // pred_check
        _
      $region10: #{tpu_custom_call.1} parent=5 // pred_check_branch
        %122 = sbr.rel (%p119) target = $region12
      $region11: #{tpu_custom_call.1} parent=5 // pred_region
        %s123 = ssub.s32 %s15, 1
        // Predicated region
        $region13: #{tpu_custom_call.1} parent=11 // pred_check
          %p124 = pneg %p62
        $region14: #{tpu_custom_call.1} parent=11 // pred_check_branch
          %126 = sbr.rel (%p124) target = $region16
        $region15: #{tpu_custom_call.1} parent=11 // pred_region
          _
        $region16: #{tpu_custom_call.1} parent=11 // pred_fallthru
          _
        // Predicated region
        $region17: #{tpu_custom_call.1} parent=11 // pred_check
          %p127 = pneg %p83
        $region18: #{tpu_custom_call.1} parent=11 // pred_check_branch
          %129 = sbr.rel (%p127) target = $region20
        $region19: #{tpu_custom_call.1} parent=11 // pred_region
          _
        $region20: #{tpu_custom_call.1} parent=11 // pred_fallthru
          _
      $region12: #{tpu_custom_call.1} parent=5 // pred_fallthru
        _
      %p130 = scmp.lt.s32.totalorder %s15, 2
      // Predicated region
      $region21: #{tpu_custom_call.1} parent=5 // pred_check
        %p131 = pneg %p130
      $region22: #{tpu_custom_call.1} parent=5 // pred_check_branch
        %133 = sbr.rel (%p131) target = $region24
      $region23: #{tpu_custom_call.1} parent=5 // pred_region
        // Predicated region
        $region25: #{tpu_custom_call.1} parent=23 // pred_check
          %p134 = pneg %p35
        $region26: #{tpu_custom_call.1} parent=23 // pred_check_branch
          %136 = sbr.rel (%p134) target = $region28
        $region27: #{tpu_custom_call.1} parent=23 // pred_region
          %s137 = sand.u32 %s25, 1
          %s138 = scalar_lea.sflag [#allocation3], %s137
          %s139 = sand.u32 %s25, 1
          %s140 = smul.addr %s139, 12
          %s141 = scalar_lea.vmem [#allocation2], %s140
          %s142 = smul.u32 3, %s15
          %s144 = ssub.s32 192, 192
          %145 = vsyncadd %s138, %s144
          %s146 = smul.addr %s142, 64
          %s147 = scalar_lea.hbm %s0, %s146
          %s149 = sshll.u32 %s141, 4
          %s150 = int_to_ptr.vmem [resolvable:$true] %s149
          %152 = dma.hbm_to_vmem [thread:$0]  %s147, 192, %s150, %s138
        $region28: #{tpu_custom_call.1} parent=23 // pred_fallthru
          _
      $region24: #{tpu_custom_call.1} parent=5 // pred_fallthru
        _
      %p153 = scmp.le.s32.totalorder 1, %s15
      %p154 = scmp.lt.s32.totalorder %s15, 3
      %p155 = pnand %p153, %p154
      %p156 = pneg %p155
      // Predicated region
      $region29: #{tpu_custom_call.1} parent=5 // pred_check
        _
      $region30: #{tpu_custom_call.1} parent=5 // pred_check_branch
        %158 = sbr.rel (%p155) target = $region32
      $region31: #{tpu_custom_call.1} parent=5 // pred_region
        %s159 = ssub.s32 %s15, 1
        %s160 = sand.u32 %s28, 1
        %s161 = scalar_lea.sflag [#allocation3], %s160
        %s162 = sand.u32 %s28, 1
        %s163 = smul.addr %s162, 12
        %s164 = scalar_lea.vmem [#allocation2], %s163
        // Predicated region
        $region33: #{tpu_custom_call.1} parent=31 // pred_check
          %p165 = pneg %p41
        $region34: #{tpu_custom_call.1} parent=31 // pred_check_branch
          %167 = sbr.rel (%p165) target = $region36
        $region35: #{tpu_custom_call.1} parent=31 // pred_region
          %168 = dma.done %s161, 192
        $region36: #{tpu_custom_call.1} parent=31 // pred_fallthru
          _
        %s169 = sand.u32 %s28, 1
        %s170 = scalar_lea.sflag [#allocation3], %s169
        %s171 = sand.u32 %s28, 1
        %s172 = smul.addr %s171, 12
        %s173 = scalar_lea.vmem [#allocation2], %s172
        %p174 = pneg %p41
        %p175 = pneg %p38
        %p176 = pneg %p62
        %p177 = pneg %p59
        %p178 = pneg %p83
        %p179 = pneg %p80
        %p180 = pneg %p109
        %p181 = pneg %p106
        %s182 = sand.u32 %s96, 1
        %s183 = scalar_lea.sflag [#allocation4], %s182
        %s184 = sand.u32 %s96, 1
        %s185 = smul.addr %s184, 24
        %s186 = scalar_lea.vmem [#allocation5], %s185
        %s187 = smul.u32 3, %s20
        %s188 = smul.u32 3, %s20
        %v189 = vld [vmem:[%s164] sm:$0xff]
        %v190 = vld [vmem:[%s164 + $0x8] sm:$0xf]
        %v191 = vmax.f32 %v189, 0.0
        %v192 = vmax.f32 %v190, 0.0
        %v193 = vld [vmem:[%s1] sm:$0xff]
        %v194 = vld [vmem:[%s2] sm:$0xff]
        %196 = vrot.lane.b32.xlu0 %v193, 124
        %v197 = vpop.permute.xlu0 %196
        %v200 = vcombine.high %v191, %v191
        %201 = vrot.lane.b32.xlu0 %v191, 127
        %v202 = vpop.permute.xlu0 %201
        %203 = vrot.lane.b32.xlu0 %v200, 127
        %v204 = vpop.permute.xlu0 %203
        %205 = vrot.lane.b32.xlu0 %v192, 127
        %v206 = vpop.permute.xlu0 %205
        %vm207 = vcmask 1039360
        %v208 = vsel %vm207, %v202, %v204
        %v209 = vsel %vm207, %v204, %v206
        %vm210 = vcmask 31744
        %v211 = vsel %vm210, %v197, 0
        %vm213 = vcmask 1043456
        %v214 = vsel %vm213, %v208, 0
        %v216 = vsel %vm213, %v209, 0
        %v218 = vsel %vm213, %v206, 0
        %220 = vmatprep.subr.mxu0 %v216
        %221 = vmatpush1.msra.mxu0 %v214
        %222 = vmatprep.subr.mxu0 0.0
        %223 = vmatpush1.msra.mxu0 0.0
        %224 = vmatprep.subr.mxu0 0.0
        %225 = vmatpush1.msra.mxu0 0.0
        %226 = vmatprep.subr.mxu0 0.0
        %227 = vmatpush1.msra.mxu0 0.0
        %228 = vmatprep.subr.mxu0 0.0
        %229 = vmatpush1.msra.mxu0 0.0
        %230 = vmatprep.subr.mxu0 0.0
        %231 = vmatpush1.msra.mxu0 0.0
        %232 = vmatprep.subr.mxu0 0.0
        %233 = vmatpush1.msra.mxu0 0.0
        %234 = vmatprep.subr.mxu0 0.0
        %235 = vmatpush1.msra.mxu0 0.0
        %236 = vmatprep.subr.mxu0 0.0
        %237 = vmatpush1.msra.mxu0 0.0
        %238 = vmatprep.subr.mxu0 0.0
        %239 = vmatpush1.msra.mxu0 0.0
        %240 = vmatprep.subr.mxu0 0.0
        %241 = vmatpush1.msra.mxu0 0.0
        %242 = vmatprep.subr.mxu0 0.0
        %243 = vmatpush1.msra.mxu0 0.0
        %244 = vmatprep.subr.mxu0 0.0
        %245 = vmatpush1.msra.mxu0 0.0
        %246 = vmatprep.subr.mxu0 0.0
        %247 = vmatpush1.msra.mxu0 0.0
        %248 = vmatprep.subr.mxu0 0.0
        %249 = vmatpush1.msra.mxu0 0.0
        %250 = vmatprep.subr.mxu0 0.0
        %251 = vmatpush1.msra.mxu0 0.0
        %252 = vmatprep.subr.mxu0 0.0
        %253 = vmatpush1.msra.mxu0 0.0
        %254 = vmatprep.subr.mxu0 0.0
        %255 = vmatpush1.msra.mxu0 0.0
        %256 = vmatprep.subr.mxu0 0.0
        %257 = vmatpush1.msra.mxu0 0.0
        %258 = vmatprep.subr.mxu0 0.0
        %259 = vmatpush1.msra.mxu0 0.0
        %260 = vmatprep.subr.mxu0 0.0
        %261 = vmatpush1.msra.mxu0 0.0
        %262 = vmatprep.subr.mxu0 0.0
        %263 = vmatpush1.msra.mxu0 0.0
        %264 = vmatprep.subr.mxu0 0.0
        %265 = vmatpush1.msra.mxu0 0.0
        %266 = vmatprep.subr.mxu0 0.0
        %267 = vmatpush1.msra.mxu0 0.0
        %268 = vmatprep.subr.mxu0 0.0
        %269 = vmatpush1.msra.mxu0 0.0
        %270 = vmatprep.subr.mxu0 0.0
        %271 = vmatpush1.msra.mxu0 0.0
        %272 = vmatprep.subr.mxu0 0.0
        %273 = vmatpush1.msra.mxu0 0.0
        %274 = vmatprep.subr.mxu0 0.0
        %275 = vmatpush1.msra.mxu0 0.0
        %276 = vmatprep.subr.mxu0 0.0
        %277 = vmatpush1.msra.mxu0 0.0
        %278 = vmatprep.subr.mxu0 0.0
        %279 = vmatpush1.msra.mxu0 0.0
        %280 = vmatprep.subr.mxu0 0.0
        %281 = vmatpush1.msra.mxu0 0.0
        %282 = vmatprep.subr.mxu0 0.0
        %283 = vmatpush1.msra.mxu0 0.0
        %284 = vmatprep.mubr.f32.mxu0 0.0
        %285 = vmatmul.mubr.f32.gmra.mrb[0].mxu0 %v211
        %v286 = vpop.f32.mrb[0].mxu0
        %v287 = vadd.f32 0.0, %v286
        %v288 = vpop.f32.mrb[0].mxu0
        %v289 = vadd.f32 0.0, %v288
        %290 = vdwg.mxu0
        %291 = vmatprep.subr.mxu0 0.0
        %292 = vmatpush1.msra.mxu0 %v218
        %293 = vmatprep.subr.mxu0 0.0
        %294 = vmatpush1.msra.mxu0 0.0
        %295 = vmatprep.subr.mxu0 0.0
        %296 = vmatpush1.msra.mxu0 0.0
        %297 = vmatprep.subr.mxu0 0.0
        %298 = vmatpush1.msra.mxu0 0.0
        %299 = vmatprep.subr.mxu0 0.0
        %300 = vmatpush1.msra.mxu0 0.0
        %301 = vmatprep.subr.mxu0 0.0
        %302 = vmatpush1.msra.mxu0 0.0
        %303 = vmatprep.subr.mxu0 0.0
        %304 = vmatpush1.msra.mxu0 0.0
        %305 = vmatprep.subr.mxu0 0.0
        %306 = vmatpush1.msra.mxu0 0.0
        %307 = vmatprep.subr.mxu0 0.0
        %308 = vmatpush1.msra.mxu0 0.0
        %309 = vmatprep.subr.mxu0 0.0
        %310 = vmatpush1.msra.mxu0 0.0
        %311 = vmatprep.subr.mxu0 0.0
        %312 = vmatpush1.msra.mxu0 0.0
        %313 = vmatprep.subr.mxu0 0.0
        %314 = vmatpush1.msra.mxu0 0.0
        %315 = vmatprep.subr.mxu0 0.0
        %316 = vmatpush1.msra.mxu0 0.0
        %317 = vmatprep.subr.mxu0 0.0
        %318 = vmatpush1.msra.mxu0 0.0
        %319 = vmatprep.subr.mxu0 0.0
        %320 = vmatpush1.msra.mxu0 0.0
        %321 = vmatprep.subr.mxu0 0.0
        %322 = vmatpush1.msra.mxu0 0.0
        %323 = vmatprep.subr.mxu0 0.0
        %324 = vmatpush1.msra.mxu0 0.0
        %325 = vmatprep.subr.mxu0 0.0
        %326 = vmatpush1.msra.mxu0 0.0
        %327 = vmatprep.subr.mxu0 0.0
        %328 = vmatpush1.msra.mxu0 0.0
        %329 = vmatprep.subr.mxu0 0.0
        %330 = vmatpush1.msra.mxu0 0.0
        %331 = vmatprep.subr.mxu0 0.0
        %332 = vmatpush1.msra.mxu0 0.0
        %333 = vmatprep.subr.mxu0 0.0
        %334 = vmatpush1.msra.mxu0 0.0
        %335 = vmatprep.subr.mxu0 0.0
        %336 = vmatpush1.msra.mxu0 0.0
        %337 = vmatprep.subr.mxu0 0.0
        %338 = vmatpush1.msra.mxu0 0.0
        %339 = vmatprep.subr.mxu0 0.0
        %340 = vmatpush1.msra.mxu0 0.0
        %341 = vmatprep.subr.mxu0 0.0
        %342 = vmatpush1.msra.mxu0 0.0
        %343 = vmatprep.subr.mxu0 0.0
        %344 = vmatpush1.msra.mxu0 0.0
        %345 = vmatprep.subr.mxu0 0.0
        %346 = vmatpush1.msra.mxu0 0.0
        %347 = vmatprep.subr.mxu0 0.0
        %348 = vmatpush1.msra.mxu0 0.0
        %349 = vmatprep.subr.mxu0 0.0
        %350 = vmatpush1.msra.mxu0 0.0
        %351 = vmatprep.subr.mxu0 0.0
        %352 = vmatpush1.msra.mxu0 0.0
        %353 = vmatprep.subr.mxu0 0.0
        %354 = vmatpush1.msra.mxu0 0.0
        %355 = vmatprep.mubr.f32.mxu0 0.0
        %356 = vmatmul.mubr.f32.gmra.mrb[0].mxu0 %v211
        %v357 = vpop.f32.mrb[0].mxu0
        %v358 = vadd.f32 0.0, %v357
        %v359 = vpop.f32.mrb[0].mxu0
        %360 = vdwg.mxu0
        %v361 = vsel %vm210, %v193, 0
        %v363 = vsel %vm213, %v191, 0
        %v365 = vsel %vm213, %v200, 0
        %v367 = vsel %vm213, %v192, 0
        %369 = vmatprep.subr.mxu0 %v365
        %370 = vmatpush1.msra.mxu0 %v363
        %371 = vmatprep.subr.mxu0 0.0
        %372 = vmatpush1.msra.mxu0 0.0
        %373 = vmatprep.subr.mxu0 0.0
        %374 = vmatpush1.msra.mxu0 0.0
        %375 = vmatprep.subr.mxu0 0.0
        %376 = vmatpush1.msra.mxu0 0.0
        %377 = vmatprep.subr.mxu0 0.0
        %378 = vmatpush1.msra.mxu0 0.0
        %379 = vmatprep.subr.mxu0 0.0
        %380 = vmatpush1.msra.mxu0 0.0
        %381 = vmatprep.subr.mxu0 0.0
        %382 = vmatpush1.msra.mxu0 0.0
        %383 = vmatprep.subr.mxu0 0.0
        %384 = vmatpush1.msra.mxu0 0.0
        %385 = vmatprep.subr.mxu0 0.0
        %386 = vmatpush1.msra.mxu0 0.0
        %387 = vmatprep.subr.mxu0 0.0
        %388 = vmatpush1.msra.mxu0 0.0
        %389 = vmatprep.subr.mxu0 0.0
        %390 = vmatpush1.msra.mxu0 0.0
        %391 = vmatprep.subr.mxu0 0.0
        %392 = vmatpush1.msra.mxu0 0.0
        %393 = vmatprep.subr.mxu0 0.0
        %394 = vmatpush1.msra.mxu0 0.0
        %395 = vmatprep.subr.mxu0 0.0
        %396 = vmatpush1.msra.mxu0 0.0
        %397 = vmatprep.subr.mxu0 0.0
        %398 = vmatpush1.msra.mxu0 0.0
        %399 = vmatprep.subr.mxu0 0.0
        %400 = vmatpush1.msra.mxu0 0.0
        %401 = vmatprep.subr.mxu0 0.0
        %402 = vmatpush1.msra.mxu0 0.0
        %403 = vmatprep.subr.mxu0 0.0
        %404 = vmatpush1.msra.mxu0 0.0
        %405 = vmatprep.subr.mxu0 0.0
        %406 = vmatpush1.msra.mxu0 0.0
        %407 = vmatprep.subr.mxu0 0.0
        %408 = vmatpush1.msra.mxu0 0.0
        %409 = vmatprep.subr.mxu0 0.0
        %410 = vmatpush1.msra.mxu0 0.0
        %411 = vmatprep.subr.mxu0 0.0
        %412 = vmatpush1.msra.mxu0 0.0
        %413 = vmatprep.subr.mxu0 0.0
        %414 = vmatpush1.msra.mxu0 0.0
        %415 = vmatprep.subr.mxu0 0.0
        %416 = vmatpush1.msra.mxu0 0.0
        %417 = vmatprep.subr.mxu0 0.0
        %418 = vmatpush1.msra.mxu0 0.0
        %419 = vmatprep.subr.mxu0 0.0
        %420 = vmatpush1.msra.mxu0 0.0
        %421 = vmatprep.subr.mxu0 0.0
        %422 = vmatpush1.msra.mxu0 0.0
        %423 = vmatprep.subr.mxu0 0.0
        %424 = vmatpush1.msra.mxu0 0.0
        %425 = vmatprep.subr.mxu0 0.0
        %426 = vmatpush1.msra.mxu0 0.0
        %427 = vmatprep.subr.mxu0 0.0
        %428 = vmatpush1.msra.mxu0 0.0
        %429 = vmatprep.subr.mxu0 0.0
        %430 = vmatpush1.msra.mxu0 0.0
        %431 = vmatprep.subr.mxu0 0.0
        %432 = vmatpush1.msra.mxu0 0.0
        %433 = vmatprep.mubr.f32.mxu0 0.0
        %434 = vmatmul.mubr.f32.gmra.mrb[0].mxu0 %v361
        %v435 = vpop.f32.mrb[0].mxu0
        %v436 = vadd.f32 %v287, %v435
        %v437 = vpop.f32.mrb[0].mxu0
        %v438 = vadd.f32 %v289, %v437
        %439 = vdwg.mxu0
        %440 = vmatprep.subr.mxu0 0.0
        %441 = vmatpush1.msra.mxu0 %v367
        %442 = vmatprep.subr.mxu0 0.0
        %443 = vmatpush1.msra.mxu0 0.0
        %444 = vmatprep.subr.mxu0 0.0
        %445 = vmatpush1.msra.mxu0 0.0
        %446 = vmatprep.subr.mxu0 0.0
        %447 = vmatpush1.msra.mxu0 0.0
        %448 = vmatprep.subr.mxu0 0.0
        %449 = vmatpush1.msra.mxu0 0.0
        %450 = vmatprep.subr.mxu0 0.0
        %451 = vmatpush1.msra.mxu0 0.0
        %452 = vmatprep.subr.mxu0 0.0
        %453 = vmatpush1.msra.mxu0 0.0
        %454 = vmatprep.subr.mxu0 0.0
        %455 = vmatpush1.msra.mxu0 0.0
        %456 = vmatprep.subr.mxu0 0.0
        %457 = vmatpush1.msra.mxu0 0.0
        %458 = vmatprep.subr.mxu0 0.0
        %459 = vmatpush1.msra.mxu0 0.0
        %460 = vmatprep.subr.mxu0 0.0
        %461 = vmatpush1.msra.mxu0 0.0
        %462 = vmatprep.subr.mxu0 0.0
        %463 = vmatpush1.msra.mxu0 0.0
        %464 = vmatprep.subr.mxu0 0.0
        %465 = vmatpush1.msra.mxu0 0.0
        %466 = vmatprep.subr.mxu0 0.0
        %467 = vmatpush1.msra.mxu0 0.0
        %468 = vmatprep.subr.mxu0 0.0
        %469 = vmatpush1.msra.mxu0 0.0
        %470 = vmatprep.subr.mxu0 0.0
        %471 = vmatpush1.msra.mxu0 0.0
        %472 = vmatprep.subr.mxu0 0.0
        %473 = vmatpush1.msra.mxu0 0.0
        %474 = vmatprep.subr.mxu0 0.0
        %475 = vmatpush1.msra.mxu0 0.0
        %476 = vmatprep.subr.mxu0 0.0
        %477 = vmatpush1.msra.mxu0 0.0
        %478 = vmatprep.subr.mxu0 0.0
        %479 = vmatpush1.msra.mxu0 0.0
        %480 = vmatprep.subr.mxu0 0.0
        %481 = vmatpush1.msra.mxu0 0.0
        %482 = vmatprep.subr.mxu0 0.0
        %483 = vmatpush1.msra.mxu0 0.0
        %484 = vmatprep.subr.mxu0 0.0
        %485 = vmatpush1.msra.mxu0 0.0
        %486 = vmatprep.subr.mxu0 0.0
        %487 = vmatpush1.msra.mxu0 0.0
        %488 = vmatprep.subr.mxu0 0.0
        %489 = vmatpush1.msra.mxu0 0.0
        %490 = vmatprep.subr.mxu0 0.0
        %491 = vmatpush1.msra.mxu0 0.0
        %492 = vmatprep.subr.mxu0 0.0
        %493 = vmatpush1.msra.mxu0 0.0
        %494 = vmatprep.subr.mxu0 0.0
        %495 = vmatpush1.msra.mxu0 0.0
        %496 = vmatprep.subr.mxu0 0.0
        %497 = vmatpush1.msra.mxu0 0.0
        %498 = vmatprep.subr.mxu0 0.0
        %499 = vmatpush1.msra.mxu0 0.0
        %500 = vmatprep.subr.mxu0 0.0
        %501 = vmatpush1.msra.mxu0 0.0
        %502 = vmatprep.subr.mxu0 0.0
        %503 = vmatpush1.msra.mxu0 0.0
        %504 = vmatprep.mubr.f32.mxu0 0.0
        %505 = vmatmul.mubr.f32.gmra.mrb[0].mxu0 %v361
        %v506 = vpop.f32.mrb[0].mxu0
        %v507 = vadd.f32 %v358, %v506
        %v508 = vpop.f32.mrb[0].mxu0
        %509 = vdwg.mxu0
        %510 = vrot.lane.b32.xlu0 %v193, 120
        %v511 = vpop.permute.xlu0 %510
        %512 = vrot.lane.b32.xlu0 %v191, 126
        %v513 = vpop.permute.xlu0 %512
        %514 = vrot.lane.b32.xlu0 %v200, 126
        %v515 = vpop.permute.xlu0 %514
        %516 = vrot.lane.b32.xlu0 %v192, 126
        %v517 = vpop.permute.xlu0 %516
        %vm518 = vcmask 1031168
        %v519 = vsel %vm518, %v513, %v515
        %v520 = vsel %vm518, %v515, %v517
        %v521 = vsel %vm210, %v511, 0
        %v523 = vsel %vm213, %v519, 0
        %v525 = vsel %vm213, %v520, 0
        %v527 = vsel %vm213, %v517, 0
        %529 = vmatprep.subr.mxu0 %v525
        %530 = vmatpush1.msra.mxu0 %v523
        %531 = vmatprep.subr.mxu0 0.0
        %532 = vmatpush1.msra.mxu0 0.0
        %533 = vmatprep.subr.mxu0 0.0
        %534 = vmatpush1.msra.mxu0 0.0
        %535 = vmatprep.subr.mxu0 0.0
        %536 = vmatpush1.msra.mxu0 0.0
        %537 = vmatprep.subr.mxu0 0.0
        %538 = vmatpush1.msra.mxu0 0.0
        %539 = vmatprep.subr.mxu0 0.0
        %540 = vmatpush1.msra.mxu0 0.0
        %541 = vmatprep.subr.mxu0 0.0
        %542 = vmatpush1.msra.mxu0 0.0
        %543 = vmatprep.subr.mxu0 0.0
        %544 = vmatpush1.msra.mxu0 0.0
        %545 = vmatprep.subr.mxu0 0.0
        %546 = vmatpush1.msra.mxu0 0.0
        %547 = vmatprep.subr.mxu0 0.0
        %548 = vmatpush1.msra.mxu0 0.0
        %549 = vmatprep.subr.mxu0 0.0
        %550 = vmatpush1.msra.mxu0 0.0
        %551 = vmatprep.subr.mxu0 0.0
        %552 = vmatpush1.msra.mxu0 0.0
        %553 = vmatprep.subr.mxu0 0.0
        %554 = vmatpush1.msra.mxu0 0.0
        %555 = vmatprep.subr.mxu0 0.0
        %556 = vmatpush1.msra.mxu0 0.0
        %557 = vmatprep.subr.mxu0 0.0
        %558 = vmatpush1.msra.mxu0 0.0
        %559 = vmatprep.subr.mxu0 0.0
        %560 = vmatpush1.msra.mxu0 0.0
        %561 = vmatprep.subr.mxu0 0.0
        %562 = vmatpush1.msra.mxu0 0.0
        %563 = vmatprep.subr.mxu0 0.0
        %564 = vmatpush1.msra.mxu0 0.0
        %565 = vmatprep.subr.mxu0 0.0
        %566 = vmatpush1.msra.mxu0 0.0
        %567 = vmatprep.subr.mxu0 0.0
        %568 = vmatpush1.msra.mxu0 0.0
        %569 = vmatprep.subr.mxu0 0.0
        %570 = vmatpush1.msra.mxu0 0.0
        %571 = vmatprep.subr.mxu0 0.0
        %572 = vmatpush1.msra.mxu0 0.0
        %573 = vmatprep.subr.mxu0 0.0
        %574 = vmatpush1.msra.mxu0 0.0
        %575 = vmatprep.subr.mxu0 0.0
        %576 = vmatpush1.msra.mxu0 0.0
        %577 = vmatprep.subr.mxu0 0.0
        %578 = vmatpush1.msra.mxu0 0.0
        %579 = vmatprep.subr.mxu0 0.0
        %580 = vmatpush1.msra.mxu0 0.0
        %581 = vmatprep.subr.mxu0 0.0
        %582 = vmatpush1.msra.mxu0 0.0
        %583 = vmatprep.subr.mxu0 0.0
        %584 = vmatpush1.msra.mxu0 0.0
        %585 = vmatprep.subr.mxu0 0.0
        %586 = vmatpush1.msra.mxu0 0.0
        %587 = vmatprep.subr.mxu0 0.0
        %588 = vmatpush1.msra.mxu0 0.0
        %589 = vmatprep.subr.mxu0 0.0
        %590 = vmatpush1.msra.mxu0 0.0
        %591 = vmatprep.subr.mxu0 0.0
        %592 = vmatpush1.msra.mxu0 0.0
        %593 = vmatprep.mubr.f32.mxu0 0.0
        %594 = vmatmul.mubr.f32.gmra.mrb[0].mxu0 %v521
        %v595 = vpop.f32.mrb[0].mxu0
        %v596 = vadd.f32 0.0, %v595
        %v597 = vpop.f32.mrb[0].mxu0
        %v598 = vadd.f32 0.0, %v597
        %599 = vdwg.mxu0
        %600 = vmatprep.subr.mxu0 0.0
        %601 = vmatpush1.msra.mxu0 %v527
        %602 = vmatprep.subr.mxu0 0.0
        %603 = vmatpush1.msra.mxu0 0.0
        %604 = vmatprep.subr.mxu0 0.0
        %605 = vmatpush1.msra.mxu0 0.0
        %606 = vmatprep.subr.mxu0 0.0
        %607 = vmatpush1.msra.mxu0 0.0
        %608 = vmatprep.subr.mxu0 0.0
        %609 = vmatpush1.msra.mxu0 0.0
        %610 = vmatprep.subr.mxu0 0.0
        %611 = vmatpush1.msra.mxu0 0.0
        %612 = vmatprep.subr.mxu0 0.0
        %613 = vmatpush1.msra.mxu0 0.0
        %614 = vmatprep.subr.mxu0 0.0
        %615 = vmatpush1.msra.mxu0 0.0
        %616 = vmatprep.subr.mxu0 0.0
        %617 = vmatpush1.msra.mxu0 0.0
        %618 = vmatprep.subr.mxu0 0.0
        %619 = vmatpush1.msra.mxu0 0.0
        %620 = vmatprep.subr.mxu0 0.0
        %621 = vmatpush1.msra.mxu0 0.0
        %622 = vmatprep.subr.mxu0 0.0
        %623 = vmatpush1.msra.mxu0 0.0
        %624 = vmatprep.subr.mxu0 0.0
        %625 = vmatpush1.msra.mxu0 0.0
        %626 = vmatprep.subr.mxu0 0.0
        %627 = vmatpush1.msra.mxu0 0.0
        %628 = vmatprep.subr.mxu0 0.0
        %629 = vmatpush1.msra.mxu0 0.0
        %630 = vmatprep.subr.mxu0 0.0
        %631 = vmatpush1.msra.mxu0 0.0
        %632 = vmatprep.subr.mxu0 0.0
        %633 = vmatpush1.msra.mxu0 0.0
        %634 = vmatprep.subr.mxu0 0.0
        %635 = vmatpush1.msra.mxu0 0.0
        %636 = vmatprep.subr.mxu0 0.0
        %637 = vmatpush1.msra.mxu0 0.0
        %638 = vmatprep.subr.mxu0 0.0
        %639 = vmatpush1.msra.mxu0 0.0
        %640 = vmatprep.subr.mxu0 0.0
        %641 = vmatpush1.msra.mxu0 0.0
        %642 = vmatprep.subr.mxu0 0.0
        %643 = vmatpush1.msra.mxu0 0.0
        %644 = vmatprep.subr.mxu0 0.0
        %645 = vmatpush1.msra.mxu0 0.0
        %646 = vmatprep.subr.mxu0 0.0
        %647 = vmatpush1.msra.mxu0 0.0
        %648 = vmatprep.subr.mxu0 0.0
        %649 = vmatpush1.msra.mxu0 0.0
        %650 = vmatprep.subr.mxu0 0.0
        %651 = vmatpush1.msra.mxu0 0.0
        %652 = vmatprep.subr.mxu0 0.0
        %653 = vmatpush1.msra.mxu0 0.0
        %654 = vmatprep.subr.mxu0 0.0
        %655 = vmatpush1.msra.mxu0 0.0
        %656 = vmatprep.subr.mxu0 0.0
        %657 = vmatpush1.msra.mxu0 0.0
        %658 = vmatprep.subr.mxu0 0.0
        %659 = vmatpush1.msra.mxu0 0.0
        %660 = vmatprep.subr.mxu0 0.0
        %661 = vmatpush1.msra.mxu0 0.0
        %662 = vmatprep.subr.mxu0 0.0
        %663 = vmatpush1.msra.mxu0 0.0
        %664 = vmatprep.mubr.f32.mxu0 0.0
        %665 = vmatmul.mubr.f32.gmra.mrb[0].mxu0 %v521
        %v666 = vpop.f32.mrb[0].mxu0
        %v667 = vadd.f32 0.0, %v666
        %v668 = vpop.f32.mrb[0].mxu0
        %669 = vdwg.mxu0
        %v670 = vadd.f32 %v436, %v596
        %v671 = vadd.f32 %v438, %v598
        %v672 = vadd.f32 %v507, %v667
        %673 = vrot.lane.b32.xlu0 %v193, 116
        %v674 = vpop.permute.xlu0 %673
        %675 = vrot.lane.b32.xlu0 %v191, 110
        %v676 = vpop.permute.xlu0 %675
        %677 = vrot.lane.b32.xlu0 %v200, 110
        %v678 = vpop.permute.xlu0 %677
        %679 = vrot.lane.b32.xlu0 %v192, 110
        %v680 = vpop.permute.xlu0 %679
        %vm681 = vcmask 900096
        %v682 = vsel %vm681, %v676, %v678
        %v683 = vsel %vm681, %v678, %v680
        %v684 = vsel %vm210, %v674, 0
        %v686 = vsel %vm213, %v682, 0
        %v688 = vsel %vm213, %v683, 0
        %v690 = vsel %vm213, %v680, 0
        %692 = vmatprep.subr.mxu0 %v688
        %693 = vmatpush1.msra.mxu0 %v686
        %694 = vmatprep.subr.mxu0 0.0
        %695 = vmatpush1.msra.mxu0 0.0
        %696 = vmatprep.subr.mxu0 0.0
        %697 = vmatpush1.msra.mxu0 0.0
        %698 = vmatprep.subr.mxu0 0.0
        %699 = vmatpush1.msra.mxu0 0.0
        %700 = vmatprep.subr.mxu0 0.0
        %701 = vmatpush1.msra.mxu0 0.0
        %702 = vmatprep.subr.mxu0 0.0
        %703 = vmatpush1.msra.mxu0 0.0
        %704 = vmatprep.subr.mxu0 0.0
        %705 = vmatpush1.msra.mxu0 0.0
        %706 = vmatprep.subr.mxu0 0.0
        %707 = vmatpush1.msra.mxu0 0.0
        %708 = vmatprep.subr.mxu0 0.0
        %709 = vmatpush1.msra.mxu0 0.0
        %710 = vmatprep.subr.mxu0 0.0
        %711 = vmatpush1.msra.mxu0 0.0
        %712 = vmatprep.subr.mxu0 0.0
        %713 = vmatpush1.msra.mxu0 0.0
        %714 = vmatprep.subr.mxu0 0.0
        %715 = vmatpush1.msra.mxu0 0.0
        %716 = vmatprep.subr.mxu0 0.0
        %717 = vmatpush1.msra.mxu0 0.0
        %718 = vmatprep.subr.mxu0 0.0
        %719 = vmatpush1.msra.mxu0 0.0
        %720 = vmatprep.subr.mxu0 0.0
        %721 = vmatpush1.msra.mxu0 0.0
        %722 = vmatprep.subr.mxu0 0.0
        %723 = vmatpush1.msra.mxu0 0.0
        %724 = vmatprep.subr.mxu0 0.0
        %725 = vmatpush1.msra.mxu0 0.0
        %726 = vmatprep.subr.mxu0 0.0
        %727 = vmatpush1.msra.mxu0 0.0
        %728 = vmatprep.subr.mxu0 0.0
        %729 = vmatpush1.msra.mxu0 0.0
        %730 = vmatprep.subr.mxu0 0.0
        %731 = vmatpush1.msra.mxu0 0.0
        %732 = vmatprep.subr.mxu0 0.0
        %733 = vmatpush1.msra.mxu0 0.0
        %734 = vmatprep.subr.mxu0 0.0
        %735 = vmatpush1.msra.mxu0 0.0
        %736 = vmatprep.subr.mxu0 0.0
        %737 = vmatpush1.msra.mxu0 0.0
        %738 = vmatprep.subr.mxu0 0.0
        %739 = vmatpush1.msra.mxu0 0.0
        %740 = vmatprep.subr.mxu0 0.0
        %741 = vmatpush1.msra.mxu0 0.0
        %742 = vmatprep.subr.mxu0 0.0
        %743 = vmatpush1.msra.mxu0 0.0
        %744 = vmatprep.subr.mxu0 0.0
        %745 = vmatpush1.msra.mxu0 0.0
        %746 = vmatprep.subr.mxu0 0.0
        %747 = vmatpush1.msra.mxu0 0.0
        %748 = vmatprep.subr.mxu0 0.0
        %749 = vmatpush1.msra.mxu0 0.0
        %750 = vmatprep.subr.mxu0 0.0
        %751 = vmatpush1.msra.mxu0 0.0
        %752 = vmatprep.subr.mxu0 0.0
        %753 = vmatpush1.msra.mxu0 0.0
        %754 = vmatprep.subr.mxu0 0.0
        %755 = vmatpush1.msra.mxu0 0.0
        %756 = vmatprep.mubr.f32.mxu0 0.0
        %757 = vmatmul.mubr.f32.gmra.mrb[0].mxu0 %v684
        %v758 = vpop.f32.mrb[0].mxu0
        %v759 = vadd.f32 0.0, %v758
        %v760 = vpop.f32.mrb[0].mxu0
        %v761 = vadd.f32 0.0, %v760
        %762 = vdwg.mxu0
        %763 = vmatprep.subr.mxu0 0.0
        %764 = vmatpush1.msra.mxu0 %v690
        %765 = vmatprep.subr.mxu0 0.0
        %766 = vmatpush1.msra.mxu0 0.0
        %767 = vmatprep.subr.mxu0 0.0
        %768 = vmatpush1.msra.mxu0 0.0
        %769 = vmatprep.subr.mxu0 0.0
        %770 = vmatpush1.msra.mxu0 0.0
        %771 = vmatprep.subr.mxu0 0.0
        %772 = vmatpush1.msra.mxu0 0.0
        %773 = vmatprep.subr.mxu0 0.0
        %774 = vmatpush1.msra.mxu0 0.0
        %775 = vmatprep.subr.mxu0 0.0
        %776 = vmatpush1.msra.mxu0 0.0
        %777 = vmatprep.subr.mxu0 0.0
        %778 = vmatpush1.msra.mxu0 0.0
        %779 = vmatprep.subr.mxu0 0.0
        %780 = vmatpush1.msra.mxu0 0.0
        %781 = vmatprep.subr.mxu0 0.0
        %782 = vmatpush1.msra.mxu0 0.0
        %783 = vmatprep.subr.mxu0 0.0
        %784 = vmatpush1.msra.mxu0 0.0
        %785 = vmatprep.subr.mxu0 0.0
        %786 = vmatpush1.msra.mxu0 0.0
        %787 = vmatprep.subr.mxu0 0.0
        %788 = vmatpush1.msra.mxu0 0.0
        %789 = vmatprep.subr.mxu0 0.0
        %790 = vmatpush1.msra.mxu0 0.0
        %791 = vmatprep.subr.mxu0 0.0
        %792 = vmatpush1.msra.mxu0 0.0
        %793 = vmatprep.subr.mxu0 0.0
        %794 = vmatpush1.msra.mxu0 0.0
        %795 = vmatprep.subr.mxu0 0.0
        %796 = vmatpush1.msra.mxu0 0.0
        %797 = vmatprep.subr.mxu0 0.0
        %798 = vmatpush1.msra.mxu0 0.0
        %799 = vmatprep.subr.mxu0 0.0
        %800 = vmatpush1.msra.mxu0 0.0
        %801 = vmatprep.subr.mxu0 0.0
        %802 = vmatpush1.msra.mxu0 0.0
        %803 = vmatprep.subr.mxu0 0.0
        %804 = vmatpush1.msra.mxu0 0.0
        %805 = vmatprep.subr.mxu0 0.0
        %806 = vmatpush1.msra.mxu0 0.0
        %807 = vmatprep.subr.mxu0 0.0
        %808 = vmatpush1.msra.mxu0 0.0
        %809 = vmatprep.subr.mxu0 0.0
        %810 = vmatpush1.msra.mxu0 0.0
        %811 = vmatprep.subr.mxu0 0.0
        %812 = vmatpush1.msra.mxu0 0.0
        %813 = vmatprep.subr.mxu0 0.0
        %814 = vmatpush1.msra.mxu0 0.0
        %815 = vmatprep.subr.mxu0 0.0
        %816 = vmatpush1.msra.mxu0 0.0
        %817 = vmatprep.subr.mxu0 0.0
        %818 = vmatpush1.msra.mxu0 0.0
        %819 = vmatprep.subr.mxu0 0.0
        %820 = vmatpush1.msra.mxu0 0.0
        %821 = vmatprep.subr.mxu0 0.0
        %822 = vmatpush1.msra.mxu0 0.0
        %823 = vmatprep.subr.mxu0 0.0
        %824 = vmatpush1.msra.mxu0 0.0
        %825 = vmatprep.subr.mxu0 0.0
        %826 = vmatpush1.msra.mxu0 0.0
        %827 = vmatprep.mubr.f32.mxu0 0.0
        %828 = vmatmul.mubr.f32.gmra.mrb[0].mxu0 %v684
        %v829 = vpop.f32.mrb[0].mxu0
        %v830 = vadd.f32 0.0, %v829
        %v831 = vpop.f32.mrb[0].mxu0
        %832 = vdwg.mxu0
        %v833 = vadd.f32 %v670, %v759
        %v834 = vadd.f32 %v671, %v761
        %v835 = vadd.f32 %v672, %v830
        %836 = vrot.lane.b32.xlu0 %v193, 112
        %v837 = vpop.permute.xlu0 %836
        %838 = vrot.lane.b32.xlu0 %v191, 109
        %v839 = vpop.permute.xlu0 %838
        %840 = vrot.lane.b32.xlu0 %v200, 109
        %v841 = vpop.permute.xlu0 %840
        %842 = vrot.lane.b32.xlu0 %v192, 109
        %v843 = vpop.permute.xlu0 %842
        %vm844 = vcmask 891904
        %v845 = vsel %vm844, %v839, %v841
        %v846 = vsel %vm844, %v841, %v843
        %v847 = vsel %vm210, %v837, 0
        %v849 = vsel %vm213, %v845, 0
        %v851 = vsel %vm213, %v846, 0
        %v853 = vsel %vm213, %v843, 0
        %855 = vmatprep.subr.mxu0 %v851
        %856 = vmatpush1.msra.mxu0 %v849
        %857 = vmatprep.subr.mxu0 0.0
        %858 = vmatpush1.msra.mxu0 0.0
        %859 = vmatprep.subr.mxu0 0.0
        %860 = vmatpush1.msra.mxu0 0.0
        %861 = vmatprep.subr.mxu0 0.0
        %862 = vmatpush1.msra.mxu0 0.0
        %863 = vmatprep.subr.mxu0 0.0
        %864 = vmatpush1.msra.mxu0 0.0
        %865 = vmatprep.subr.mxu0 0.0
        %866 = vmatpush1.msra.mxu0 0.0
        %867 = vmatprep.subr.mxu0 0.0
        %868 = vmatpush1.msra.mxu0 0.0
        %869 = vmatprep.subr.mxu0 0.0
        %870 = vmatpush1.msra.mxu0 0.0
        %871 = vmatprep.subr.mxu0 0.0
        %872 = vmatpush1.msra.mxu0 0.0
        %873 = vmatprep.subr.mxu0 0.0
        %874 = vmatpush1.msra.mxu0 0.0
        %875 = vmatprep.subr.mxu0 0.0
        %876 = vmatpush1.msra.mxu0 0.0
        %877 = vmatprep.subr.mxu0 0.0
        %878 = vmatpush1.msra.mxu0 0.0
        %879 = vmatprep.subr.mxu0 0.0
        %880 = vmatpush1.msra.mxu0 0.0
        %881 = vmatprep.subr.mxu0 0.0
        %882 = vmatpush1.msra.mxu0 0.0
        %883 = vmatprep.subr.mxu0 0.0
        %884 = vmatpush1.msra.mxu0 0.0
        %885 = vmatprep.subr.mxu0 0.0
        %886 = vmatpush1.msra.mxu0 0.0
        %887 = vmatprep.subr.mxu0 0.0
        %888 = vmatpush1.msra.mxu0 0.0
        %889 = vmatprep.subr.mxu0 0.0
        %890 = vmatpush1.msra.mxu0 0.0
        %891 = vmatprep.subr.mxu0 0.0
        %892 = vmatpush1.msra.mxu0 0.0
        %893 = vmatprep.subr.mxu0 0.0
        %894 = vmatpush1.msra.mxu0 0.0
        %895 = vmatprep.subr.mxu0 0.0
        %896 = vmatpush1.msra.mxu0 0.0
        %897 = vmatprep.subr.mxu0 0.0
        %898 = vmatpush1.msra.mxu0 0.0
        %899 = vmatprep.subr.mxu0 0.0
        %900 = vmatpush1.msra.mxu0 0.0
        %901 = vmatprep.subr.mxu0 0.0
        %902 = vmatpush1.msra.mxu0 0.0
        %903 = vmatprep.subr.mxu0 0.0
        %904 = vmatpush1.msra.mxu0 0.0
        %905 = vmatprep.subr.mxu0 0.0
        %906 = vmatpush1.msra.mxu0 0.0
        %907 = vmatprep.subr.mxu0 0.0
        %908 = vmatpush1.msra.mxu0 0.0
        %909 = vmatprep.subr.mxu0 0.0
        %910 = vmatpush1.msra.mxu0 0.0
        %911 = vmatprep.subr.mxu0 0.0
        %912 = vmatpush1.msra.mxu0 0.0
        %913 = vmatprep.subr.mxu0 0.0
        %914 = vmatpush1.msra.mxu0 0.0
        %915 = vmatprep.subr.mxu0 0.0
        %916 = vmatpush1.msra.mxu0 0.0
        %917 = vmatprep.subr.mxu0 0.0
        %918 = vmatpush1.msra.mxu0 0.0
        %919 = vmatprep.mubr.f32.mxu0 0.0
        %920 = vmatmul.mubr.f32.gmra.mrb[0].mxu0 %v847
        %v921 = vpop.f32.mrb[0].mxu0
        %v922 = vadd.f32 0.0, %v921
        %v923 = vpop.f32.mrb[0].mxu0
        %v924 = vadd.f32 0.0, %v923
        %925 = vdwg.mxu0
        %926 = vmatprep.subr.mxu0 0.0
        %927 = vmatpush1.msra.mxu0 %v853
        %928 = vmatprep.subr.mxu0 0.0
        %929 = vmatpush1.msra.mxu0 0.0
        %930 = vmatprep.subr.mxu0 0.0
        %931 = vmatpush1.msra.mxu0 0.0
        %932 = vmatprep.subr.mxu0 0.0
        %933 = vmatpush1.msra.mxu0 0.0
        %934 = vmatprep.subr.mxu0 0.0
        %935 = vmatpush1.msra.mxu0 0.0
        %936 = vmatprep.subr.mxu0 0.0
        %937 = vmatpush1.msra.mxu0 0.0
        %938 = vmatprep.subr.mxu0 0.0
        %939 = vmatpush1.msra.mxu0 0.0
        %940 = vmatprep.subr.mxu0 0.0
        %941 = vmatpush1.msra.mxu0 0.0
        %942 = vmatprep.subr.mxu0 0.0
        %943 = vmatpush1.msra.mxu0 0.0
        %944 = vmatprep.subr.mxu0 0.0
        %945 = vmatpush1.msra.mxu0 0.0
        %946 = vmatprep.subr.mxu0 0.0
        %947 = vmatpush1.msra.mxu0 0.0
        %948 = vmatprep.subr.mxu0 0.0
        %949 = vmatpush1.msra.mxu0 0.0
        %950 = vmatprep.subr.mxu0 0.0
        %951 = vmatpush1.msra.mxu0 0.0
        %952 = vmatprep.subr.mxu0 0.0
        %953 = vmatpush1.msra.mxu0 0.0
        %954 = vmatprep.subr.mxu0 0.0
        %955 = vmatpush1.msra.mxu0 0.0
        %956 = vmatprep.subr.mxu0 0.0
        %957 = vmatpush1.msra.mxu0 0.0
        %958 = vmatprep.subr.mxu0 0.0
        %959 = vmatpush1.msra.mxu0 0.0
        %960 = vmatprep.subr.mxu0 0.0
        %961 = vmatpush1.msra.mxu0 0.0
        %962 = vmatprep.subr.mxu0 0.0
        %963 = vmatpush1.msra.mxu0 0.0
        %964 = vmatprep.subr.mxu0 0.0
        %965 = vmatpush1.msra.mxu0 0.0
        %966 = vmatprep.subr.mxu0 0.0
        %967 = vmatpush1.msra.mxu0 0.0
        %968 = vmatprep.subr.mxu0 0.0
        %969 = vmatpush1.msra.mxu0 0.0
        %970 = vmatprep.subr.mxu0 0.0
        %971 = vmatpush1.msra.mxu0 0.0
        %972 = vmatprep.subr.mxu0 0.0
        %973 = vmatpush1.msra.mxu0 0.0
        %974 = vmatprep.subr.mxu0 0.0
        %975 = vmatpush1.msra.mxu0 0.0
        %976 = vmatprep.subr.mxu0 0.0
        %977 = vmatpush1.msra.mxu0 0.0
        %978 = vmatprep.subr.mxu0 0.0
        %979 = vmatpush1.msra.mxu0 0.0
        %980 = vmatprep.subr.mxu0 0.0
        %981 = vmatpush1.msra.mxu0 0.0
        %982 = vmatprep.subr.mxu0 0.0
        %983 = vmatpush1.msra.mxu0 0.0
        %984 = vmatprep.subr.mxu0 0.0
        %985 = vmatpush1.msra.mxu0 0.0
        %986 = vmatprep.subr.mxu0 0.0
        %987 = vmatpush1.msra.mxu0 0.0
        %988 = vmatprep.subr.mxu0 0.0
        %989 = vmatpush1.msra.mxu0 0.0
        %990 = vmatprep.mubr.f32.mxu0 0.0
        %991 = vmatmul.mubr.f32.gmra.mrb[0].mxu0 %v847
        %v992 = vpop.f32.mrb[0].mxu0
        %v993 = vadd.f32 0.0, %v992
        %v994 = vpop.f32.mrb[0].mxu0
        %995 = vdwg.mxu0
        %v996 = vadd.f32 %v833, %v922
        %v997 = vadd.f32 %v834, %v924
        %v998 = vadd.f32 %v835, %v993
        %999 = vrot.lane.b32.xlu0 %v193, 108
        %v1000 = vpop.permute.xlu0 %999
        %1001 = vrot.lane.b32.xlu0 %v191, 108
        %v1002 = vpop.permute.xlu0 %1001
        %1003 = vrot.lane.b32.xlu0 %v200, 108
        %v1004 = vpop.permute.xlu0 %1003
        %1005 = vrot.lane.b32.xlu0 %v192, 108
        %v1006 = vpop.permute.xlu0 %1005
        %vm1007 = vcmask 883712
        %v1008 = vsel %vm1007, %v1002, %v1004
        %v1009 = vsel %vm1007, %v1004, %v1006
        %v1010 = vsel %vm210, %v1000, 0
        %v1012 = vsel %vm213, %v1008, 0
        %v1014 = vsel %vm213, %v1009, 0
        %v1016 = vsel %vm213, %v1006, 0
        %1018 = vmatprep.subr.mxu0 %v1014
        %1019 = vmatpush1.msra.mxu0 %v1012
        %1020 = vmatprep.subr.mxu0 0.0
        %1021 = vmatpush1.msra.mxu0 0.0
        %1022 = vmatprep.subr.mxu0 0.0
        %1023 = vmatpush1.msra.mxu0 0.0
        %1024 = vmatprep.subr.mxu0 0.0
        %1025 = vmatpush1.msra.mxu0 0.0
        %1026 = vmatprep.subr.mxu0 0.0
        %1027 = vmatpush1.msra.mxu0 0.0
        %1028 = vmatprep.subr.mxu0 0.0
        %1029 = vmatpush1.msra.mxu0 0.0
        %1030 = vmatprep.subr.mxu0 0.0
        %1031 = vmatpush1.msra.mxu0 0.0
        %1032 = vmatprep.subr.mxu0 0.0
        %1033 = vmatpush1.msra.mxu0 0.0
        %1034 = vmatprep.subr.mxu0 0.0
        %1035 = vmatpush1.msra.mxu0 0.0
        %1036 = vmatprep.subr.mxu0 0.0
        %1037 = vmatpush1.msra.mxu0 0.0
        %1038 = vmatprep.subr.mxu0 0.0
        %1039 = vmatpush1.msra.mxu0 0.0
        %1040 = vmatprep.subr.mxu0 0.0
        %1041 = vmatpush1.msra.mxu0 0.0
        %1042 = vmatprep.subr.mxu0 0.0
        %1043 = vmatpush1.msra.mxu0 0.0
        %1044 = vmatprep.subr.mxu0 0.0
        %1045 = vmatpush1.msra.mxu0 0.0
        %1046 = vmatprep.subr.mxu0 0.0
        %1047 = vmatpush1.msra.mxu0 0.0
        %1048 = vmatprep.subr.mxu0 0.0
        %1049 = vmatpush1.msra.mxu0 0.0
        %1050 = vmatprep.subr.mxu0 0.0
        %1051 = vmatpush1.msra.mxu0 0.0
        %1052 = vmatprep.subr.mxu0 0.0
        %1053 = vmatpush1.msra.mxu0 0.0
        %1054 = vmatprep.subr.mxu0 0.0
        %1055 = vmatpush1.msra.mxu0 0.0
        %1056 = vmatprep.subr.mxu0 0.0
        %1057 = vmatpush1.msra.mxu0 0.0
        %1058 = vmatprep.subr.mxu0 0.0
        %1059 = vmatpush1.msra.mxu0 0.0
        %1060 = vmatprep.subr.mxu0 0.0
        %1061 = vmatpush1.msra.mxu0 0.0
        %1062 = vmatprep.subr.mxu0 0.0
        %1063 = vmatpush1.msra.mxu0 0.0
        %1064 = vmatprep.subr.mxu0 0.0
        %1065 = vmatpush1.msra.mxu0 0.0
        %1066 = vmatprep.subr.mxu0 0.0
        %1067 = vmatpush1.msra.mxu0 0.0
        %1068 = vmatprep.subr.mxu0 0.0
        %1069 = vmatpush1.msra.mxu0 0.0
        %1070 = vmatprep.subr.mxu0 0.0
        %1071 = vmatpush1.msra.mxu0 0.0
        %1072 = vmatprep.subr.mxu0 0.0
        %1073 = vmatpush1.msra.mxu0 0.0
        %1074 = vmatprep.subr.mxu0 0.0
        %1075 = vmatpush1.msra.mxu0 0.0
        %1076 = vmatprep.subr.mxu0 0.0
        %1077 = vmatpush1.msra.mxu0 0.0
        %1078 = vmatprep.subr.mxu0 0.0
        %1079 = vmatpush1.msra.mxu0 0.0
        %1080 = vmatprep.subr.mxu0 0.0
        %1081 = vmatpush1.msra.mxu0 0.0
        %1082 = vmatprep.mubr.f32.mxu0 0.0
        %1083 = vmatmul.mubr.f32.gmra.mrb[0].mxu0 %v1010
        %v1084 = vpop.f32.mrb[0].mxu0
        %v1085 = vadd.f32 0.0, %v1084
        %v1086 = vpop.f32.mrb[0].mxu0
        %v1087 = vadd.f32 0.0, %v1086
        %1088 = vdwg.mxu0
        %1089 = vmatprep.subr.mxu0 0.0
        %1090 = vmatpush1.msra.mxu0 %v1016
        %1091 = vmatprep.subr.mxu0 0.0
        %1092 = vmatpush1.msra.mxu0 0.0
        %1093 = vmatprep.subr.mxu0 0.0
        %1094 = vmatpush1.msra.mxu0 0.0
        %1095 = vmatprep.subr.mxu0 0.0
        %1096 = vmatpush1.msra.mxu0 0.0
        %1097 = vmatprep.subr.mxu0 0.0
        %1098 = vmatpush1.msra.mxu0 0.0
        %1099 = vmatprep.subr.mxu0 0.0
        %1100 = vmatpush1.msra.mxu0 0.0
        %1101 = vmatprep.subr.mxu0 0.0
        %1102 = vmatpush1.msra.mxu0 0.0
        %1103 = vmatprep.subr.mxu0 0.0
        %1104 = vmatpush1.msra.mxu0 0.0
        %1105 = vmatprep.subr.mxu0 0.0
        %1106 = vmatpush1.msra.mxu0 0.0
        %1107 = vmatprep.subr.mxu0 0.0
        %1108 = vmatpush1.msra.mxu0 0.0
        %1109 = vmatprep.subr.mxu0 0.0
        %1110 = vmatpush1.msra.mxu0 0.0
        %1111 = vmatprep.subr.mxu0 0.0
        %1112 = vmatpush1.msra.mxu0 0.0
        %1113 = vmatprep.subr.mxu0 0.0
        %1114 = vmatpush1.msra.mxu0 0.0
        %1115 = vmatprep.subr.mxu0 0.0
        %1116 = vmatpush1.msra.mxu0 0.0
        %1117 = vmatprep.subr.mxu0 0.0
        %1118 = vmatpush1.msra.mxu0 0.0
        %1119 = vmatprep.subr.mxu0 0.0
        %1120 = vmatpush1.msra.mxu0 0.0
        %1121 = vmatprep.subr.mxu0 0.0
        %1122 = vmatpush1.msra.mxu0 0.0
        %1123 = vmatprep.subr.mxu0 0.0
        %1124 = vmatpush1.msra.mxu0 0.0
        %1125 = vmatprep.subr.mxu0 0.0
        %1126 = vmatpush1.msra.mxu0 0.0
        %1127 = vmatprep.subr.mxu0 0.0
        %1128 = vmatpush1.msra.mxu0 0.0
        %1129 = vmatprep.subr.mxu0 0.0
        %1130 = vmatpush1.msra.mxu0 0.0
        %1131 = vmatprep.subr.mxu0 0.0
        %1132 = vmatpush1.msra.mxu0 0.0
        %1133 = vmatprep.subr.mxu0 0.0
        %1134 = vmatpush1.msra.mxu0 0.0
        %1135 = vmatprep.subr.mxu0 0.0
        %1136 = vmatpush1.msra.mxu0 0.0
        %1137 = vmatprep.subr.mxu0 0.0
        %1138 = vmatpush1.msra.mxu0 0.0
        %1139 = vmatprep.subr.mxu0 0.0
        %1140 = vmatpush1.msra.mxu0 0.0
        %1141 = vmatprep.subr.mxu0 0.0
        %1142 = vmatpush1.msra.mxu0 0.0
        %1143 = vmatprep.subr.mxu0 0.0
        %1144 = vmatpush1.msra.mxu0 0.0
        %1145 = vmatprep.subr.mxu0 0.0
        %1146 = vmatpush1.msra.mxu0 0.0
        %1147 = vmatprep.subr.mxu0 0.0
        %1148 = vmatpush1.msra.mxu0 0.0
        %1149 = vmatprep.subr.mxu0 0.0
        %1150 = vmatpush1.msra.mxu0 0.0
        %1151 = vmatprep.subr.mxu0 0.0
        %1152 = vmatpush1.msra.mxu0 0.0
        %1153 = vmatprep.mubr.f32.mxu0 0.0
        %1154 = vmatmul.mubr.f32.gmra.mrb[0].mxu0 %v1010
        %v1155 = vpop.f32.mrb[0].mxu0
        %v1156 = vadd.f32 0.0, %v1155
        %v1157 = vpop.f32.mrb[0].mxu0
        %1158 = vdwg.mxu0
        %v1159 = vadd.f32 %v996, %v1085
        %v1160 = vadd.f32 %v997, %v1087
        %v1161 = vadd.f32 %v998, %v1156
        %1162 = vrot.lane.b32.xlu0 %v193, 104
        %v1163 = vpop.permute.xlu0 %1162
        %1164 = vrot.lane.b32.xlu0 %v191, 92
        %v1165 = vpop.permute.xlu0 %1164
        %1166 = vrot.lane.b32.xlu0 %v200, 92
        %v1167 = vpop.permute.xlu0 %1166
        %1168 = vrot.lane.b32.xlu0 %v192, 92
        %v1169 = vpop.permute.xlu0 %1168
        %vm1170 = vcmask 752640
        %v1171 = vsel %vm1170, %v1165, %v1167
        %v1172 = vsel %vm1170, %v1167, %v1169
        %v1173 = vsel %vm210, %v1163, 0
        %v1175 = vsel %vm213, %v1171, 0
        %v1177 = vsel %vm213, %v1172, 0
        %v1179 = vsel %vm213, %v1169, 0
        %1181 = vmatprep.subr.mxu0 %v1177
        %1182 = vmatpush1.msra.mxu0 %v1175
        %1183 = vmatprep.subr.mxu0 0.0
        %1184 = vmatpush1.msra.mxu0 0.0
        %1185 = vmatprep.subr.mxu0 0.0
        %1186 = vmatpush1.msra.mxu0 0.0
        %1187 = vmatprep.subr.mxu0 0.0
        %1188 = vmatpush1.msra.mxu0 0.0
        %1189 = vmatprep.subr.mxu0 0.0
        %1190 = vmatpush1.msra.mxu0 0.0
        %1191 = vmatprep.subr.mxu0 0.0
        %1192 = vmatpush1.msra.mxu0 0.0
        %1193 = vmatprep.subr.mxu0 0.0
        %1194 = vmatpush1.msra.mxu0 0.0
        %1195 = vmatprep.subr.mxu0 0.0
        %1196 = vmatpush1.msra.mxu0 0.0
        %1197 = vmatprep.subr.mxu0 0.0
        %1198 = vmatpush1.msra.mxu0 0.0
        %1199 = vmatprep.subr.mxu0 0.0
        %1200 = vmatpush1.msra.mxu0 0.0
        %1201 = vmatprep.subr.mxu0 0.0
        %1202 = vmatpush1.msra.mxu0 0.0
        %1203 = vmatprep.subr.mxu0 0.0
        %1204 = vmatpush1.msra.mxu0 0.0
        %1205 = vmatprep.subr.mxu0 0.0
        %1206 = vmatpush1.msra.mxu0 0.0
        %1207 = vmatprep.subr.mxu0 0.0
        %1208 = vmatpush1.msra.mxu0 0.0
        %1209 = vmatprep.subr.mxu0 0.0
        %1210 = vmatpush1.msra.mxu0 0.0
        %1211 = vmatprep.subr.mxu0 0.0
        %1212 = vmatpush1.msra.mxu0 0.0
        %1213 = vmatprep.subr.mxu0 0.0
        %1214 = vmatpush1.msra.mxu0 0.0
        %1215 = vmatprep.subr.mxu0 0.0
        %1216 = vmatpush1.msra.mxu0 0.0
        %1217 = vmatprep.subr.mxu0 0.0
        %1218 = vmatpush1.msra.mxu0 0.0
        %1219 = vmatprep.subr.mxu0 0.0
        %1220 = vmatpush1.msra.mxu0 0.0
        %1221 = vmatprep.subr.mxu0 0.0
        %1222 = vmatpush1.msra.mxu0 0.0
        %1223 = vmatprep.subr.mxu0 0.0
        %1224 = vmatpush1.msra.mxu0 0.0
        %1225 = vmatprep.subr.mxu0 0.0
        %1226 = vmatpush1.msra.mxu0 0.0
        %1227 = vmatprep.subr.mxu0 0.0
        %1228 = vmatpush1.msra.mxu0 0.0
        %1229 = vmatprep.subr.mxu0 0.0
        %1230 = vmatpush1.msra.mxu0 0.0
        %1231 = vmatprep.subr.mxu0 0.0
        %1232 = vmatpush1.msra.mxu0 0.0
        %1233 = vmatprep.subr.mxu0 0.0
        %1234 = vmatpush1.msra.mxu0 0.0
        %1235 = vmatprep.subr.mxu0 0.0
        %1236 = vmatpush1.msra.mxu0 0.0
        %1237 = vmatprep.subr.mxu0 0.0
        %1238 = vmatpush1.msra.mxu0 0.0
        %1239 = vmatprep.subr.mxu0 0.0
        %1240 = vmatpush1.msra.mxu0 0.0
        %1241 = vmatprep.subr.mxu0 0.0
        %1242 = vmatpush1.msra.mxu0 0.0
        %1243 = vmatprep.subr.mxu0 0.0
        %1244 = vmatpush1.msra.mxu0 0.0
        %1245 = vmatprep.mubr.f32.mxu0 0.0
        %1246 = vmatmul.mubr.f32.gmra.mrb[0].mxu0 %v1173
        %v1247 = vpop.f32.mrb[0].mxu0
        %v1248 = vadd.f32 0.0, %v1247
        %v1249 = vpop.f32.mrb[0].mxu0
        %v1250 = vadd.f32 0.0, %v1249
        %1251 = vdwg.mxu0
        %1252 = vmatprep.subr.mxu0 0.0
        %1253 = vmatpush1.msra.mxu0 %v1179
        %1254 = vmatprep.subr.mxu0 0.0
        %1255 = vmatpush1.msra.mxu0 0.0
        %1256 = vmatprep.subr.mxu0 0.0
        %1257 = vmatpush1.msra.mxu0 0.0
        %1258 = vmatprep.subr.mxu0 0.0
        %1259 = vmatpush1.msra.mxu0 0.0
        %1260 = vmatprep.subr.mxu0 0.0
        %1261 = vmatpush1.msra.mxu0 0.0
        %1262 = vmatprep.subr.mxu0 0.0
        %1263 = vmatpush1.msra.mxu0 0.0
        %1264 = vmatprep.subr.mxu0 0.0
        %1265 = vmatpush1.msra.mxu0 0.0
        %1266 = vmatprep.subr.mxu0 0.0
        %1267 = vmatpush1.msra.mxu0 0.0
        %1268 = vmatprep.subr.mxu0 0.0
        %1269 = vmatpush1.msra.mxu0 0.0
        %1270 = vmatprep.subr.mxu0 0.0
        %1271 = vmatpush1.msra.mxu0 0.0
        %1272 = vmatprep.subr.mxu0 0.0
        %1273 = vmatpush1.msra.mxu0 0.0
        %1274 = vmatprep.subr.mxu0 0.0
        %1275 = vmatpush1.msra.mxu0 0.0
        %1276 = vmatprep.subr.mxu0 0.0
        %1277 = vmatpush1.msra.mxu0 0.0
        %1278 = vmatprep.subr.mxu0 0.0
        %1279 = vmatpush1.msra.mxu0 0.0
        %1280 = vmatprep.subr.mxu0 0.0
        %1281 = vmatpush1.msra.mxu0 0.0
        %1282 = vmatprep.subr.mxu0 0.0
        %1283 = vmatpush1.msra.mxu0 0.0
        %1284 = vmatprep.subr.mxu0 0.0
        %1285 = vmatpush1.msra.mxu0 0.0
        %1286 = vmatprep.subr.mxu0 0.0
        %1287 = vmatpush1.msra.mxu0 0.0
        %1288 = vmatprep.subr.mxu0 0.0
        %1289 = vmatpush1.msra.mxu0 0.0
        %1290 = vmatprep.subr.mxu0 0.0
        %1291 = vmatpush1.msra.mxu0 0.0
        %1292 = vmatprep.subr.mxu0 0.0
        %1293 = vmatpush1.msra.mxu0 0.0
        %1294 = vmatprep.subr.mxu0 0.0
        %1295 = vmatpush1.msra.mxu0 0.0
        %1296 = vmatprep.subr.mxu0 0.0
        %1297 = vmatpush1.msra.mxu0 0.0
        %1298 = vmatprep.subr.mxu0 0.0
        %1299 = vmatpush1.msra.mxu0 0.0
        %1300 = vmatprep.subr.mxu0 0.0
        %1301 = vmatpush1.msra.mxu0 0.0
        %1302 = vmatprep.subr.mxu0 0.0
        %1303 = vmatpush1.msra.mxu0 0.0
        %1304 = vmatprep.subr.mxu0 0.0
        %1305 = vmatpush1.msra.mxu0 0.0
        %1306 = vmatprep.subr.mxu0 0.0
        %1307 = vmatpush1.msra.mxu0 0.0
        %1308 = vmatprep.subr.mxu0 0.0
        %1309 = vmatpush1.msra.mxu0 0.0
        %1310 = vmatprep.subr.mxu0 0.0
        %1311 = vmatpush1.msra.mxu0 0.0
        %1312 = vmatprep.subr.mxu0 0.0
        %1313 = vmatpush1.msra.mxu0 0.0
        %1314 = vmatprep.subr.mxu0 0.0
        %1315 = vmatpush1.msra.mxu0 0.0
        %1316 = vmatprep.mubr.f32.mxu0 0.0
        %1317 = vmatmul.mubr.f32.gmra.mrb[0].mxu0 %v1173
        %v1318 = vpop.f32.mrb[0].mxu0
        %v1319 = vadd.f32 0.0, %v1318
        %v1320 = vpop.f32.mrb[0].mxu0
        %1321 = vdwg.mxu0
        %v1322 = vadd.f32 %v1159, %v1248
        %v1323 = vadd.f32 %v1160, %v1250
        %v1324 = vadd.f32 %v1161, %v1319
        %1325 = vrot.lane.b32.xlu0 %v193, 100
        %v1326 = vpop.permute.xlu0 %1325
        %1327 = vrot.lane.b32.xlu0 %v191, 91
        %v1328 = vpop.permute.xlu0 %1327
        %1329 = vrot.lane.b32.xlu0 %v200, 91
        %v1330 = vpop.permute.xlu0 %1329
        %1331 = vrot.lane.b32.xlu0 %v192, 91
        %v1332 = vpop.permute.xlu0 %1331
        %vm1333 = vcmask 744448
        %v1334 = vsel %vm1333, %v1328, %v1330
        %v1335 = vsel %vm1333, %v1330, %v1332
        %v1336 = vsel %vm210, %v1326, 0
        %v1338 = vsel %vm213, %v1334, 0
        %v1340 = vsel %vm213, %v1335, 0
        %v1342 = vsel %vm213, %v1332, 0
        %1344 = vmatprep.subr.mxu0 %v1340
        %1345 = vmatpush1.msra.mxu0 %v1338
        %1346 = vmatprep.subr.mxu0 0.0
        %1347 = vmatpush1.msra.mxu0 0.0
        %1348 = vmatprep.subr.mxu0 0.0
        %1349 = vmatpush1.msra.mxu0 0.0
        %1350 = vmatprep.subr.mxu0 0.0
        %1351 = vmatpush1.msra.mxu0 0.0
        %1352 = vmatprep.subr.mxu0 0.0
        %1353 = vmatpush1.msra.mxu0 0.0
        %1354 = vmatprep.subr.mxu0 0.0
        %1355 = vmatpush1.msra.mxu0 0.0
        %1356 = vmatprep.subr.mxu0 0.0
        %1357 = vmatpush1.msra.mxu0 0.0
        %1358 = vmatprep.subr.mxu0 0.0
        %1359 = vmatpush1.msra.mxu0 0.0
        %1360 = vmatprep.subr.mxu0 0.0
        %1361 = vmatpush1.msra.mxu0 0.0
        %1362 = vmatprep.subr.mxu0 0.0
        %1363 = vmatpush1.msra.mxu0 0.0
        %1364 = vmatprep.subr.mxu0 0.0
        %1365 = vmatpush1.msra.mxu0 0.0
        %1366 = vmatprep.subr.mxu0 0.0
        %1367 = vmatpush1.msra.mxu0 0.0
        %1368 = vmatprep.subr.mxu0 0.0
        %1369 = vmatpush1.msra.mxu0 0.0
        %1370 = vmatprep.subr.mxu0 0.0
        %1371 = vmatpush1.msra.mxu0 0.0
        %1372 = vmatprep.subr.mxu0 0.0
        %1373 = vmatpush1.msra.mxu0 0.0
        %1374 = vmatprep.subr.mxu0 0.0
        %1375 = vmatpush1.msra.mxu0 0.0
        %1376 = vmatprep.subr.mxu0 0.0
        %1377 = vmatpush1.msra.mxu0 0.0
        %1378 = vmatprep.subr.mxu0 0.0
        %1379 = vmatpush1.msra.mxu0 0.0
        %1380 = vmatprep.subr.mxu0 0.0
        %1381 = vmatpush1.msra.mxu0 0.0
        %1382 = vmatprep.subr.mxu0 0.0
        %1383 = vmatpush1.msra.mxu0 0.0
        %1384 = vmatprep.subr.mxu0 0.0
        %1385 = vmatpush1.msra.mxu0 0.0
        %1386 = vmatprep.subr.mxu0 0.0
        %1387 = vmatpush1.msra.mxu0 0.0
        %1388 = vmatprep.subr.mxu0 0.0
        %1389 = vmatpush1.msra.mxu0 0.0
        %1390 = vmatprep.subr.mxu0 0.0
        %1391 = vmatpush1.msra.mxu0 0.0
        %1392 = vmatprep.subr.mxu0 0.0
        %1393 = vmatpush1.msra.mxu0 0.0
        %1394 = vmatprep.subr.mxu0 0.0
        %1395 = vmatpush1.msra.mxu0 0.0
        %1396 = vmatprep.subr.mxu0 0.0
        %1397 = vmatpush1.msra.mxu0 0.0
        %1398 = vmatprep.subr.mxu0 0.0
        %1399 = vmatpush1.msra.mxu0 0.0
        %1400 = vmatprep.subr.mxu0 0.0
        %1401 = vmatpush1.msra.mxu0 0.0
        %1402 = vmatprep.subr.mxu0 0.0
        %1403 = vmatpush1.msra.mxu0 0.0
        %1404 = vmatprep.subr.mxu0 0.0
        %1405 = vmatpush1.msra.mxu0 0.0
        %1406 = vmatprep.subr.mxu0 0.0
        %1407 = vmatpush1.msra.mxu0 0.0
        %1408 = vmatprep.mubr.f32.mxu0 0.0
        %1409 = vmatmul.mubr.f32.gmra.mrb[0].mxu0 %v1336
        %v1410 = vpop.f32.mrb[0].mxu0
        %v1411 = vadd.f32 0.0, %v1410
        %v1412 = vpop.f32.mrb[0].mxu0
        %v1413 = vadd.f32 0.0, %v1412
        %1414 = vdwg.mxu0
        %1415 = vmatprep.subr.mxu0 0.0
        %1416 = vmatpush1.msra.mxu0 %v1342
        %1417 = vmatprep.subr.mxu0 0.0
        %1418 = vmatpush1.msra.mxu0 0.0
        %1419 = vmatprep.subr.mxu0 0.0
        %1420 = vmatpush1.msra.mxu0 0.0
        %1421 = vmatprep.subr.mxu0 0.0
        %1422 = vmatpush1.msra.mxu0 0.0
        %1423 = vmatprep.subr.mxu0 0.0
        %1424 = vmatpush1.msra.mxu0 0.0
        %1425 = vmatprep.subr.mxu0 0.0
        %1426 = vmatpush1.msra.mxu0 0.0
        %1427 = vmatprep.subr.mxu0 0.0
        %1428 = vmatpush1.msra.mxu0 0.0
        %1429 = vmatprep.subr.mxu0 0.0
        %1430 = vmatpush1.msra.mxu0 0.0
        %1431 = vmatprep.subr.mxu0 0.0
        %1432 = vmatpush1.msra.mxu0 0.0
        %1433 = vmatprep.subr.mxu0 0.0
        %1434 = vmatpush1.msra.mxu0 0.0
        %1435 = vmatprep.subr.mxu0 0.0
        %1436 = vmatpush1.msra.mxu0 0.0
        %1437 = vmatprep.subr.mxu0 0.0
        %1438 = vmatpush1.msra.mxu0 0.0
        %1439 = vmatprep.subr.mxu0 0.0
        %1440 = vmatpush1.msra.mxu0 0.0
        %1441 = vmatprep.subr.mxu0 0.0
        %1442 = vmatpush1.msra.mxu0 0.0
        %1443 = vmatprep.subr.mxu0 0.0
        %1444 = vmatpush1.msra.mxu0 0.0
        %1445 = vmatprep.subr.mxu0 0.0
        %1446 = vmatpush1.msra.mxu0 0.0
        %1447 = vmatprep.subr.mxu0 0.0
        %1448 = vmatpush1.msra.mxu0 0.0
        %1449 = vmatprep.subr.mxu0 0.0
        %1450 = vmatpush1.msra.mxu0 0.0
        %1451 = vmatprep.subr.mxu0 0.0
        %1452 = vmatpush1.msra.mxu0 0.0
        %1453 = vmatprep.subr.mxu0 0.0
        %1454 = vmatpush1.msra.mxu0 0.0
        %1455 = vmatprep.subr.mxu0 0.0
        %1456 = vmatpush1.msra.mxu0 0.0
        %1457 = vmatprep.subr.mxu0 0.0
        %1458 = vmatpush1.msra.mxu0 0.0
        %1459 = vmatprep.subr.mxu0 0.0
        %1460 = vmatpush1.msra.mxu0 0.0
        %1461 = vmatprep.subr.mxu0 0.0
        %1462 = vmatpush1.msra.mxu0 0.0
        %1463 = vmatprep.subr.mxu0 0.0
        %1464 = vmatpush1.msra.mxu0 0.0
        %1465 = vmatprep.subr.mxu0 0.0
        %1466 = vmatpush1.msra.mxu0 0.0
        %1467 = vmatprep.subr.mxu0 0.0
        %1468 = vmatpush1.msra.mxu0 0.0
        %1469 = vmatprep.subr.mxu0 0.0
        %1470 = vmatpush1.msra.mxu0 0.0
        %1471 = vmatprep.subr.mxu0 0.0
        %1472 = vmatpush1.msra.mxu0 0.0
        %1473 = vmatprep.subr.mxu0 0.0
        %1474 = vmatpush1.msra.mxu0 0.0
        %1475 = vmatprep.subr.mxu0 0.0
        %1476 = vmatpush1.msra.mxu0 0.0
        %1477 = vmatprep.subr.mxu0 0.0
        %1478 = vmatpush1.msra.mxu0 0.0
        %1479 = vmatprep.mubr.f32.mxu0 0.0
        %1480 = vmatmul.mubr.f32.gmra.mrb[0].mxu0 %v1336
        %v1481 = vpop.f32.mrb[0].mxu0
        %v1482 = vadd.f32 0.0, %v1481
        %v1483 = vpop.f32.mrb[0].mxu0
        %1484 = vdwg.mxu0
        %v1485 = vadd.f32 %v1322, %v1411
        %v1486 = vadd.f32 %v1323, %v1413
        %v1487 = vadd.f32 %v1324, %v1482
        %1488 = vrot.lane.b32.xlu0 %v193, 96
        %v1489 = vpop.permute.xlu0 %1488
        %1490 = vrot.lane.b32.xlu0 %v191, 90
        %v1491 = vpop.permute.xlu0 %1490
        %1492 = vrot.lane.b32.xlu0 %v200, 90
        %v1493 = vpop.permute.xlu0 %1492
        %1494 = vrot.lane.b32.xlu0 %v192, 90
        %v1495 = vpop.permute.xlu0 %1494
        %vm1496 = vcmask 736256
        %v1497 = vsel %vm1496, %v1491, %v1493
        %v1498 = vsel %vm1496, %v1493, %v1495
        %v1499 = vsel %vm210, %v1489, 0
        %v1501 = vsel %vm213, %v1497, 0
        %v1503 = vsel %vm213, %v1498, 0
        %v1505 = vsel %vm213, %v1495, 0
        %1507 = vmatprep.subr.mxu0 %v1503
        %1508 = vmatpush1.msra.mxu0 %v1501
        %1509 = vmatprep.subr.mxu0 0.0
        %1510 = vmatpush1.msra.mxu0 0.0
        %1511 = vmatprep.subr.mxu0 0.0
        %1512 = vmatpush1.msra.mxu0 0.0
        %1513 = vmatprep.subr.mxu0 0.0
        %1514 = vmatpush1.msra.mxu0 0.0
        %1515 = vmatprep.subr.mxu0 0.0
        %1516 = vmatpush1.msra.mxu0 0.0
        %1517 = vmatprep.subr.mxu0 0.0
        %1518 = vmatpush1.msra.mxu0 0.0
        %1519 = vmatprep.subr.mxu0 0.0
        %1520 = vmatpush1.msra.mxu0 0.0
        %1521 = vmatprep.subr.mxu0 0.0
        %1522 = vmatpush1.msra.mxu0 0.0
        %1523 = vmatprep.subr.mxu0 0.0
        %1524 = vmatpush1.msra.mxu0 0.0
        %1525 = vmatprep.subr.mxu0 0.0
        %1526 = vmatpush1.msra.mxu0 0.0
        %1527 = vmatprep.subr.mxu0 0.0
        %1528 = vmatpush1.msra.mxu0 0.0
        %1529 = vmatprep.subr.mxu0 0.0
        %1530 = vmatpush1.msra.mxu0 0.0
        %1531 = vmatprep.subr.mxu0 0.0
        %1532 = vmatpush1.msra.mxu0 0.0
        %1533 = vmatprep.subr.mxu0 0.0
        %1534 = vmatpush1.msra.mxu0 0.0
        %1535 = vmatprep.subr.mxu0 0.0
        %1536 = vmatpush1.msra.mxu0 0.0
        %1537 = vmatprep.subr.mxu0 0.0
        %1538 = vmatpush1.msra.mxu0 0.0
        %1539 = vmatprep.subr.mxu0 0.0
        %1540 = vmatpush1.msra.mxu0 0.0
        %1541 = vmatprep.subr.mxu0 0.0
        %1542 = vmatpush1.msra.mxu0 0.0
        %1543 = vmatprep.subr.mxu0 0.0
        %1544 = vmatpush1.msra.mxu0 0.0
        %1545 = vmatprep.subr.mxu0 0.0
        %1546 = vmatpush1.msra.mxu0 0.0
        %1547 = vmatprep.subr.mxu0 0.0
        %1548 = vmatpush1.msra.mxu0 0.0
        %1549 = vmatprep.subr.mxu0 0.0
        %1550 = vmatpush1.msra.mxu0 0.0
        %1551 = vmatprep.subr.mxu0 0.0
        %1552 = vmatpush1.msra.mxu0 0.0
        %1553 = vmatprep.subr.mxu0 0.0
        %1554 = vmatpush1.msra.mxu0 0.0
        %1555 = vmatprep.subr.mxu0 0.0
        %1556 = vmatpush1.msra.mxu0 0.0
        %1557 = vmatprep.subr.mxu0 0.0
        %1558 = vmatpush1.msra.mxu0 0.0
        %1559 = vmatprep.subr.mxu0 0.0
        %1560 = vmatpush1.msra.mxu0 0.0
        %1561 = vmatprep.subr.mxu0 0.0
        %1562 = vmatpush1.msra.mxu0 0.0
        %1563 = vmatprep.subr.mxu0 0.0
        %1564 = vmatpush1.msra.mxu0 0.0
        %1565 = vmatprep.subr.mxu0 0.0
        %1566 = vmatpush1.msra.mxu0 0.0
        %1567 = vmatprep.subr.mxu0 0.0
        %1568 = vmatpush1.msra.mxu0 0.0
        %1569 = vmatprep.subr.mxu0 0.0
        %1570 = vmatpush1.msra.mxu0 0.0
        %1571 = vmatprep.mubr.f32.mxu0 0.0
        %1572 = vmatmul.mubr.f32.gmra.mrb[0].mxu0 %v1499
        %v1573 = vpop.f32.mrb[0].mxu0
        %v1574 = vadd.f32 0.0, %v1573
        %v1575 = vpop.f32.mrb[0].mxu0
        %v1576 = vadd.f32 0.0, %v1575
        %1577 = vdwg.mxu0
        %1578 = vmatprep.subr.mxu0 0.0
        %1579 = vmatpush1.msra.mxu0 %v1505
        %1580 = vmatprep.subr.mxu0 0.0
        %1581 = vmatpush1.msra.mxu0 0.0
        %1582 = vmatprep.subr.mxu0 0.0
        %1583 = vmatpush1.msra.mxu0 0.0
        %1584 = vmatprep.subr.mxu0 0.0
        %1585 = vmatpush1.msra.mxu0 0.0
        %1586 = vmatprep.subr.mxu0 0.0
        %1587 = vmatpush1.msra.mxu0 0.0
        %1588 = vmatprep.subr.mxu0 0.0
        %1589 = vmatpush1.msra.mxu0 0.0
        %1590 = vmatprep.subr.mxu0 0.0
        %1591 = vmatpush1.msra.mxu0 0.0
        %1592 = vmatprep.subr.mxu0 0.0
        %1593 = vmatpush1.msra.mxu0 0.0
        %1594 = vmatprep.subr.mxu0 0.0
        %1595 = vmatpush1.msra.mxu0 0.0
        %1596 = vmatprep.subr.mxu0 0.0
        %1597 = vmatpush1.msra.mxu0 0.0
        %1598 = vmatprep.subr.mxu0 0.0
        %1599 = vmatpush1.msra.mxu0 0.0
        %1600 = vmatprep.subr.mxu0 0.0
        %1601 = vmatpush1.msra.mxu0 0.0
        %1602 = vmatprep.subr.mxu0 0.0
        %1603 = vmatpush1.msra.mxu0 0.0
        %1604 = vmatprep.subr.mxu0 0.0
        %1605 = vmatpush1.msra.mxu0 0.0
        %1606 = vmatprep.subr.mxu0 0.0
        %1607 = vmatpush1.msra.mxu0 0.0
        %1608 = vmatprep.subr.mxu0 0.0
        %1609 = vmatpush1.msra.mxu0 0.0
        %1610 = vmatprep.subr.mxu0 0.0
        %1611 = vmatpush1.msra.mxu0 0.0
        %1612 = vmatprep.subr.mxu0 0.0
        %1613 = vmatpush1.msra.mxu0 0.0
        %1614 = vmatprep.subr.mxu0 0.0
        %1615 = vmatpush1.msra.mxu0 0.0
        %1616 = vmatprep.subr.mxu0 0.0
        %1617 = vmatpush1.msra.mxu0 0.0
        %1618 = vmatprep.subr.mxu0 0.0
        %1619 = vmatpush1.msra.mxu0 0.0
        %1620 = vmatprep.subr.mxu0 0.0
        %1621 = vmatpush1.msra.mxu0 0.0
        %1622 = vmatprep.subr.mxu0 0.0
        %1623 = vmatpush1.msra.mxu0 0.0
        %1624 = vmatprep.subr.mxu0 0.0
        %1625 = vmatpush1.msra.mxu0 0.0
        %1626 = vmatprep.subr.mxu0 0.0
        %1627 = vmatpush1.msra.mxu0 0.0
        %1628 = vmatprep.subr.mxu0 0.0
        %1629 = vmatpush1.msra.mxu0 0.0
        %1630 = vmatprep.subr.mxu0 0.0
        %1631 = vmatpush1.msra.mxu0 0.0
        %1632 = vmatprep.subr.mxu0 0.0
        %1633 = vmatpush1.msra.mxu0 0.0
        %1634 = vmatprep.subr.mxu0 0.0
        %1635 = vmatpush1.msra.mxu0 0.0
        %1636 = vmatprep.subr.mxu0 0.0
        %1637 = vmatpush1.msra.mxu0 0.0
        %1638 = vmatprep.subr.mxu0 0.0
        %1639 = vmatpush1.msra.mxu0 0.0
        %1640 = vmatprep.subr.mxu0 0.0
        %1641 = vmatpush1.msra.mxu0 0.0
        %1642 = vmatprep.mubr.f32.mxu0 0.0
        %1643 = vmatmul.mubr.f32.gmra.mrb[0].mxu0 %v1499
        %v1644 = vpop.f32.mrb[0].mxu0
        %v1645 = vadd.f32 0.0, %v1644
        %v1646 = vpop.f32.mrb[0].mxu0
        %1647 = vdwg.mxu0
        %v1648 = vadd.f32 %v1485, %v1574
        %v1649 = vadd.f32 %v1486, %v1576
        %v1650 = vadd.f32 %v1487, %v1645
        %1652 = vset.pattern.permute.xlu0 0
        %1653 = vperm.xlu0 %1652, %v194
        %v1654 = vpop.permute.xlu0 %1653
        %v1656 = vadd.f32 %v1648, %v1654
        %v1657 = vadd.f32 %v1649, %v1654
        %v1658 = vadd.f32 %v1650, %v1654
        %1659 = vst [vmem:[%s186] sm:$0xff] %v1656
        %1660 = vst [vmem:[%s186 + $0x8] sm:$0xff] %v1657
        %vm1661 = vcmask 261120
        %1662 = vst.msk [vmem:[%s186 + $0x10] sm:$0xff] %vm1661, %v1658
        %s1663 = sand.u32 %s96, 1
        %s1664 = scalar_lea.sflag [#allocation4], %s1663
        %s1665 = sand.u32 %s96, 1
        %s1666 = smul.addr %s1665, 24
        %s1667 = scalar_lea.vmem [#allocation5], %s1666
        // Predicated region
        $region37: #{tpu_custom_call.1} parent=31 // pred_check
          %p1668 = pneg %p106
        $region38: #{tpu_custom_call.1} parent=31 // pred_check_branch
          %1670 = sbr.rel (%p1668) target = $region40
        $region39: #{tpu_custom_call.1} parent=31 // pred_region
          %s1671 = smul.u32 3, %s20
          %s1673 = ssub.s32 384, 384
          %1674 = vsyncadd %s1664, %s1673
          %s1675 = smul.addr %s1671, 128
          %s1676 = scalar_lea.hbm %s3, %s1675
          %s1678 = sshll.u32 %s1667, 4
          %s1679 = int_to_ptr.vmem [resolvable:$true] %s1678
          %1681 = dma.vmem_to_hbm [thread:$0]  %s1679, 384, %s1676, %s1664
        $region40: #{tpu_custom_call.1} parent=31 // pred_fallthru
          _
      $region32: #{tpu_custom_call.1} parent=5 // pred_fallthru
        _
      %p1682 = scmp.le.s32.totalorder 2, %s15
      // Predicated region
      $region41: #{tpu_custom_call.1} parent=5 // pred_check
        %p1683 = pneg %p1682
      $region42: #{tpu_custom_call.1} parent=5 // pred_check_branch
        %1685 = sbr.rel (%p1683) target = $region44
      $region43: #{tpu_custom_call.1} parent=5 // pred_region
        %s1686 = ssub.s32 %s15, 2
        // Predicated region
        $region45: #{tpu_custom_call.1} parent=43 // pred_check
          %p1687 = pneg %p112
        $region46: #{tpu_custom_call.1} parent=43 // pred_check_branch
          %1689 = sbr.rel (%p1687) target = $region48
        $region47: #{tpu_custom_call.1} parent=43 // pred_region
          %s1690 = sand.u32 %s97, 1
          %s1691 = scalar_lea.sflag [#allocation4], %s1690
          %s1692 = sand.u32 %s97, 1
          %s1693 = smul.addr %s1692, 24
          %s1694 = scalar_lea.vmem [#allocation5], %s1693
          %1695 = dma.done %s1691, 384
        $region48: #{tpu_custom_call.1} parent=43 // pred_fallthru
          _
      $region44: #{tpu_custom_call.1} parent=5 // pred_fallthru
        _
    $region6: #{tpu_custom_call.1} parent=1 // loop_footer
      %s19 = sadd.s32 1, %s15
    $region7: #{tpu_custom_call.1} parent=1 // loop_footer_branch
      %14 = sbr.rel target = $region3
    $region8: #{tpu_custom_call.1} parent=1 // loop_exit
      _
    %1696 = vsyncpa [#allocation3], 1
    %s1697 = scalar_lea.sflag [#allocation3], 1
    %1698 = vsyncpa %s1697, 1
    %1699 = vsyncpa [#allocation4], 1
    %s1700 = scalar_lea.sflag [#allocation4], 1
    %1701 = vsyncpa %s1700, 1

</llo_original>
